<compile_context>
chip_gen: v7x
topology: tpu7x:2x2x1
jax: 0.10.0
libtpu: 0.0.40
codegen_flags: <defaults>
</compile_context>

<pallas_src>
import functools

import jax
import jax.numpy as jnp
from jax import lax
from jax.experimental import pallas as pl
from jax.experimental.pallas import tpu as pltpu


def _embed_concat_kernel(last_row,
                         pu_ref, pv_ref, nv_ref, u_hbm_ref, v_hbm_ref,
                         o1_ref, o2_ref, o3_ref, o4_ref,
                         u_tbl, v_tbl):
    """One grid step: gather T rows from each table and write 4 concat blocks.

    pu_ref/pv_ref/nv_ref: (T, 1) int32 index blocks (VMEM)
    u_hbm_ref/v_hbm_ref:  (E, D) float weight tables (memory_space=pl.ANY)
    o*_ref:               (T, 2*D) float output blocks
    u_tbl/v_tbl:          (E, D) persistent VMEM scratch (single-buffered copy)
    last_row:             python int, the row forced to 1.0 (emb_size - 1)
    """
    E, D = u_tbl.shape
    T = pu_ref.shape[0]

    # One-time: copy both tables into single-buffered VMEM scratch and apply
    # the "row emb_size-1 = 1.0" override once (instead of per-step selects).
    @pl.when(pl.program_id(0) == 0)
    def _():
        pltpu.sync_copy(u_hbm_ref, u_tbl)
        pltpu.sync_copy(v_hbm_ref, v_tbl)
        ones_row = jnp.ones((1, D), u_tbl.dtype)
        u_tbl[last_row:last_row + 1, :] = ones_row
        v_tbl[last_row:last_row + 1, :] = ones_row.astype(v_tbl.dtype)

    col_ids = lax.broadcasted_iota(jnp.int32, (T, E), 1)

    # One-hot gathers on the MXU.  HIGHEST precision => exact row selection
    # for f32 tables (one non-zero term per output element).
    oh_u = (pu_ref[...] == col_ids).astype(jnp.float32)          # (T, E)
    oh_v = (pv_ref[...] == col_ids).astype(jnp.float32)          # (T, E)
    oh_n = (nv_ref[...] == col_ids).astype(jnp.float32)          # (T, E)

    emb_u = jnp.dot(oh_u, u_tbl[...],
                    preferred_element_type=jnp.float32,
                    precision=lax.Precision.HIGHEST)             # (T, D)

    # Fused V-table gather: one (2T, E) @ (E, D) MXU pass for pos_v and neg_v.
    oh_vn = jnp.concatenate([oh_v, oh_n], axis=0)                # (2T, E)
    emb_vn = jnp.dot(oh_vn, v_tbl[...],
                     preferred_element_type=jnp.float32,
                     precision=lax.Precision.HIGHEST)            # (2T, D)
    emb_v = emb_vn[:T, :]
    emb_n = emb_vn[T:, :]

    emb_u = emb_u.astype(o1_ref.dtype)
    emb_v = emb_v.astype(o1_ref.dtype)
    emb_n = emb_n.astype(o1_ref.dtype)

    # Direct half-slice stores; each half is lane-aligned (multiple of 128).
    o1_ref[:, :D] = emb_u
    o1_ref[:, D:] = emb_v
    o2_ref[:, :D] = emb_v
    o2_ref[:, D:] = emb_u
    o3_ref[:, :D] = emb_n
    o3_ref[:, D:] = emb_u
    o4_ref[:, :D] = emb_u
    o4_ref[:, D:] = emb_n


def hetero_node_embedding_forward(u_weights, v_weights, pos_u, pos_v, neg_v,
                                  emb_size, *, tile=256):
    """Pallas implementation of HeterogeneousNodeEmbedding.forward.

    u_weights, v_weights: [E, D] float weight tables
    pos_u, pos_v: [B] int indices; neg_v: [B] or [B, 1] int indices
    emb_size: python int -- row (emb_size - 1) of both tables is treated as 1.0
    Returns (pos1, pos2, neg1, neg2), each [B, 2*D].
    """
    pos_u = jnp.asarray(pos_u, jnp.int32).reshape(-1)
    pos_v = jnp.asarray(pos_v, jnp.int32).reshape(-1)
    neg_v = jnp.asarray(neg_v, jnp.int32).reshape(-1)   # torch .squeeze() on [B,1]

    B = pos_u.shape[0]
    E, D = u_weights.shape
    assert D % 128 == 0, "emb_dimension must be lane-aligned (multiple of 128)"
    # TODO(synk): pad the feature dim for D not a multiple of 128.

    # Big, lane-dense tiles (clamped for tiny batches so we don't over-pad).
    T = min(int(tile), pl.cdiv(B, 8) * 8)
    B_pad = pl.cdiv(B, T) * T
    pad = B_pad - B
    if pad:
        pos_u = jnp.pad(pos_u, (0, pad))
        pos_v = jnp.pad(pos_v, (0, pad))
        neg_v = jnp.pad(neg_v, (0, pad))

    pu2 = pos_u.reshape(B_pad, 1)
    pv2 = pos_v.reshape(B_pad, 1)
    nv2 = neg_v.reshape(B_pad, 1)

    idx_spec = pl.BlockSpec((T, 1), lambda i: (i, 0))
    tbl_spec = pl.BlockSpec(memory_space=pl.ANY)      # raw ref; copied once
    out_spec = pl.BlockSpec((T, 2 * D), lambda i: (i, 0))
    out_sds = jax.ShapeDtypeStruct((B_pad, 2 * D), u_weights.dtype)

    # VMEM budget: single-buffered tables + 4 double-buffered output blocks +
    # 3 small (lane-padded) index blocks + headroom.  Cap at 48 MiB (fits all
    # generations, including v7x's 64 MiB/TC).
    itemsize = jnp.dtype(u_weights.dtype).itemsize
    table_bytes = 2 * E * D * itemsize
    out_bytes = 4 * 2 * T * 2 * D * itemsize
    idx_bytes = 3 * 2 * T * 128 * 4
    vmem_limit = int(min(48 * 1024 * 1024,
                         max(16 * 1024 * 1024,
                             table_bytes + out_bytes + idx_bytes + (4 << 20))))

    kernel = functools.partial(_embed_concat_kernel, int(emb_size) - 1)

    outs = pl.pallas_call(
        kernel,
        out_shape=(out_sds, out_sds, out_sds, out_sds),
        grid_spec=pltpu.PrefetchScalarGridSpec(
            num_scalar_prefetch=0,
            grid=(B_pad // T,),
            in_specs=[idx_spec, idx_spec, idx_spec, tbl_spec, tbl_spec],
            out_specs=[out_spec, out_spec, out_spec, out_spec],
            scratch_shapes=[pltpu.VMEM((E, D), u_weights.dtype),
                            pltpu.VMEM((E, D), v_weights.dtype)],
        ),
        compiler_params=pltpu.CompilerParams(
            # "arbitrary": the one-time table copy at program_id==0 must be
            # visible to every later grid step (sequential on one core).
            dimension_semantics=("arbitrary",),
            vmem_limit_bytes=vmem_limit,
        ),
    )(pu2, pv2, nv2, u_weights, v_weights)

    if pad:
        outs = tuple(o[:B] for o in outs)
    return outs


if __name__ == "__main__":
    # Small, deterministic example consistent with the module.
    emb_size = 16        # number of embedding rows
    emb_dimension = 128  # D (lane-aligned)
    B = 16               # batch of (pos_u, pos_v, neg_v) index triples

    key = jax.random.PRNGKey(0)
    ku, kp1, kp2, kn = jax.random.split(key, 4)

    initrange = 1.0 / emb_dimension
    u_weights = jax.random.uniform(
        ku, (emb_size, emb_dimension), jnp.float32,
        minval=-initrange, maxval=initrange)
    v_weights = jnp.zeros((emb_size, emb_dimension), jnp.float32)

    pos_u = jax.random.randint(kp1, (B,), 0, emb_size, dtype=jnp.int32)
    pos_v = jax.random.randint(kp2, (B,), 0, emb_size, dtype=jnp.int32)
    neg_v = jax.random.randint(kn, (B, 1), 0, emb_size, dtype=jnp.int32)

    outs = hetero_node_embedding_forward(
        u_weights, v_weights, pos_u, pos_v, neg_v, emb_size)
    outs = jax.block_until_ready(outs)

    # Pure-JAX reference check.
    u_ref = u_weights.at[emb_size - 1].set(1.0)
    v_ref = v_weights.at[emb_size - 1].set(1.0)
    eu = u_ref[pos_u]
    ev = v_ref[pos_v]
    en = v_ref[neg_v.reshape(-1)]
    exp = (jnp.concatenate([eu, ev], axis=1),
           jnp.concatenate([ev, eu], axis=1),
           jnp.concatenate([en, eu], axis=1),
           jnp.concatenate([eu, en], axis=1))
    for got, want in zip(outs, exp):
        assert got.shape == want.shape and got.dtype == want.dtype
        assert jnp.allclose(got, want, atol=1e-6), "mismatch vs reference"

    print("KERNEL_OK")
</pallas_src>

<mosaic_0001>
module attributes {stable_mosaic.version = 11 : i64} {
  func.func @_embed_concat_kernel(%arg0: i32, %arg1: memref<16x1xi32, #tpu.memory_space<vmem>>, %arg2: memref<16x1xi32, #tpu.memory_space<vmem>>, %arg3: memref<16x1xi32, #tpu.memory_space<vmem>>, %arg4: memref<16x128xf32, #tpu.memory_space<any>>, %arg5: memref<16x128xf32, #tpu.memory_space<any>>, %arg6: memref<16x256xf32, #tpu.memory_space<vmem>>, %arg7: memref<16x256xf32, #tpu.memory_space<vmem>>, %arg8: memref<16x256xf32, #tpu.memory_space<vmem>>, %arg9: memref<16x256xf32, #tpu.memory_space<vmem>>, %arg10: memref<16x128xf32, #tpu.memory_space<vmem>>, %arg11: memref<16x128xf32, #tpu.memory_space<vmem>>) attributes {dimension_semantics = [#tpu.dimension_semantics<arbitrary>], iteration_bounds = array<i64: 1>, scalar_prefetch = 0 : i64, scratch_operands = 2 : i64, tpu.core_type = #tpu.core_type<tc>, window_params = [{transform_indices = @transform_0, window_bounds = array<i64: 16, 1>}, {transform_indices = @transform_1, window_bounds = array<i64: 16, 1>}, {transform_indices = @transform_2, window_bounds = array<i64: 16, 1>}, {}, {}, {transform_indices = @transform_5, window_bounds = array<i64: 16, 256>}, {transform_indices = @transform_6, window_bounds = array<i64: 16, 256>}, {transform_indices = @transform_7, window_bounds = array<i64: 16, 256>}, {transform_indices = @transform_8, window_bounds = array<i64: 16, 256>}]} {
    %c0_i32 = arith.constant 0 : i32
    %0 = arith.cmpi eq, %arg0, %c0_i32 : i32
    %1 = arith.extui %0 : i1 to i32
    %c0_i32_0 = arith.constant 0 : i32
    %2 = arith.cmpi ne, %1, %c0_i32_0 : i32
    scf.if %2 {
      "tpu.region"() ({
        %37 = tpu.sem_alloc : memref<!tpu.dma_semaphore, #tpu.memory_space<semaphore_mem>>
        tpu.enqueue_dma source(%arg4 : memref<16x128xf32, #tpu.memory_space<any>>) target(%arg10 : memref<16x128xf32, #tpu.memory_space<vmem>>) target_semaphore(%37 : memref<!tpu.dma_semaphore, #tpu.memory_space<semaphore_mem>>)
        tpu.wait_dma2 semaphore(%37 : memref<!tpu.dma_semaphore, #tpu.memory_space<semaphore_mem>>) src(%arg4 : memref<16x128xf32, #tpu.memory_space<any>>) dst(%arg10 : memref<16x128xf32, #tpu.memory_space<vmem>>)
        tpu.yield
      }) : () -> ()
      "tpu.region"() ({
        %37 = tpu.sem_alloc : memref<!tpu.dma_semaphore, #tpu.memory_space<semaphore_mem>>
        tpu.enqueue_dma source(%arg5 : memref<16x128xf32, #tpu.memory_space<any>>) target(%arg11 : memref<16x128xf32, #tpu.memory_space<vmem>>) target_semaphore(%37 : memref<!tpu.dma_semaphore, #tpu.memory_space<semaphore_mem>>)
        tpu.wait_dma2 semaphore(%37 : memref<!tpu.dma_semaphore, #tpu.memory_space<semaphore_mem>>) src(%arg5 : memref<16x128xf32, #tpu.memory_space<any>>) dst(%arg11 : memref<16x128xf32, #tpu.memory_space<vmem>>)
        tpu.yield
      }) : () -> ()
      %cst_26 = arith.constant 1.000000e+00 : f32
      %34 = vector.broadcast %cst_26 : f32 to vector<1x128xf32>
      %c15 = arith.constant 15 : index
      %c0_27 = arith.constant 0 : index
      %35 = vector.load %arg10[%c15, %c0_27] : memref<16x128xf32, #tpu.memory_space<vmem>>, vector<1x128xf32>
      tpu.vector_store %arg10[%c15, %c0_27], %34 {strides = array<i32>} : memref<16x128xf32, #tpu.memory_space<vmem>>, vector<1x128xf32>,
      %c15_28 = arith.constant 15 : index
      %c0_29 = arith.constant 0 : index
      %36 = vector.load %arg11[%c15_28, %c0_29] : memref<16x128xf32, #tpu.memory_space<vmem>>, vector<1x128xf32>
      tpu.vector_store %arg11[%c15_28, %c0_29], %34 {strides = array<i32>} : memref<16x128xf32, #tpu.memory_space<vmem>>, vector<1x128xf32>,
    } else {
    }
    %3 = tpu.iota {dimensions = array<i32: 1>} : vector<16x16xi32>
    %c0 = arith.constant 0 : index
    %c0_1 = arith.constant 0 : index
    %4 = vector.load %arg1[%c0, %c0_1] : memref<16x1xi32, #tpu.memory_space<vmem>>, vector<16x1xi32>
    %5 = vector.broadcast %4 : vector<16x1xi32> to vector<16x16xi32>
    %6 = arith.cmpi eq, %5, %3 : vector<16x16xi32>
    %7 = arith.extui %6 : vector<16x16xi1> to vector<16x16xi32>
    %8 = arith.sitofp %7 : vector<16x16xi32> to vector<16x16xf32>
    %c0_2 = arith.constant 0 : index
    %c0_3 = arith.constant 0 : index
    %9 = vector.load %arg2[%c0_2, %c0_3] : memref<16x1xi32, #tpu.memory_space<vmem>>, vector<16x1xi32>
    %10 = vector.broadcast %9 : vector<16x1xi32> to vector<16x16xi32>
    %11 = arith.cmpi eq, %10, %3 : vector<16x16xi32>
    %12 = arith.extui %11 : vector<16x16xi1> to vector<16x16xi32>
    %13 = arith.sitofp %12 : vector<16x16xi32> to vector<16x16xf32>
    %c0_4 = arith.constant 0 : index
    %c0_5 = arith.constant 0 : index
    %14 = vector.load %arg3[%c0_4, %c0_5] : memref<16x1xi32, #tpu.memory_space<vmem>>, vector<16x1xi32>
    %15 = vector.broadcast %14 : vector<16x1xi32> to vector<16x16xi32>
    %16 = arith.cmpi eq, %15, %3 : vector<16x16xi32>
    %17 = arith.extui %16 : vector<16x16xi1> to vector<16x16xi32>
    %18 = arith.sitofp %17 : vector<16x16xi32> to vector<16x16xf32>
    %c0_6 = arith.constant 0 : index
    %c0_7 = arith.constant 0 : index
    %19 = vector.load %arg10[%c0_6, %c0_7] : memref<16x128xf32, #tpu.memory_space<vmem>>, vector<16x128xf32>
    %cst = arith.constant dense<0.000000e+00> : vector<16x128xf32>
    %20 = tpu.matmul %8, %19, %cst {dimension_numbers = #tpu.dot_dimension_numbers<[1], [0], [0], [1], [0, 0, 1, 1], [], []>, precision = #tpu.contract_precision<fp32>} : vector<16x16xf32>, vector<16x128xf32>, vector<16x128xf32> -> vector<16x128xf32>
    %21 = tpu.concatenate %13, %18 in 0 : vector<16x16xf32>, vector<16x16xf32> -> vector<32x16xf32>
    %c0_8 = arith.constant 0 : index
    %c0_9 = arith.constant 0 : index
    %22 = vector.load %arg11[%c0_8, %c0_9] : memref<16x128xf32, #tpu.memory_space<vmem>>, vector<16x128xf32>
    %cst_10 = arith.constant dense<0.000000e+00> : vector<32x128xf32>
    %23 = tpu.matmul %21, %22, %cst_10 {dimension_numbers = #tpu.dot_dimension_numbers<[1], [0], [0], [1], [0, 0, 1, 1], [], []>, precision = #tpu.contract_precision<fp32>} : vector<32x16xf32>, vector<16x128xf32>, vector<32x128xf32> -> vector<32x128xf32>
    %24 = vector.extract_strided_slice %23 {offsets = [0, 0], sizes = [16, 128], strides = [1, 1]} : vector<32x128xf32> to vector<16x128xf32>
    %25 = vector.extract_strided_slice %23 {offsets = [16, 0], sizes = [16, 128], strides = [1, 1]} : vector<32x128xf32> to vector<16x128xf32>
    %c0_11 = arith.constant 0 : index
    %c0_12 = arith.constant 0 : index
    %26 = vector.load %arg6[%c0_11, %c0_12] : memref<16x256xf32, #tpu.memory_space<vmem>>, vector<16x128xf32>
    tpu.vector_store %arg6[%c0_11, %c0_12], %20 {strides = array<i32>} : memref<16x256xf32, #tpu.memory_space<vmem>>, vector<16x128xf32>,
    %c0_13 = arith.constant 0 : index
    %c128 = arith.constant 128 : index
    %27 = vector.load %arg6[%c0_13, %c128] : memref<16x256xf32, #tpu.memory_space<vmem>>, vector<16x128xf32>
    tpu.vector_store %arg6[%c0_13, %c128], %24 {strides = array<i32>} : memref<16x256xf32, #tpu.memory_space<vmem>>, vector<16x128xf32>,
    %c0_14 = arith.constant 0 : index
    %c0_15 = arith.constant 0 : index
    %28 = vector.load %arg7[%c0_14, %c0_15] : memref<16x256xf32, #tpu.memory_space<vmem>>, vector<16x128xf32>
    tpu.vector_store %arg7[%c0_14, %c0_15], %24 {strides = array<i32>} : memref<16x256xf32, #tpu.memory_space<vmem>>, vector<16x128xf32>,
    %c0_16 = arith.constant 0 : index
    %c128_17 = arith.constant 128 : index
    %29 = vector.load %arg7[%c0_16, %c128_17] : memref<16x256xf32, #tpu.memory_space<vmem>>, vector<16x128xf32>
    tpu.vector_store %arg7[%c0_16, %c128_17], %20 {strides = array<i32>} : memref<16x256xf32, #tpu.memory_space<vmem>>, vector<16x128xf32>,
    %c0_18 = arith.constant 0 : index
    %c0_19 = arith.constant 0 : index
    %30 = vector.load %arg8[%c0_18, %c0_19] : memref<16x256xf32, #tpu.memory_space<vmem>>, vector<16x128xf32>
    tpu.vector_store %arg8[%c0_18, %c0_19], %25 {strides = array<i32>} : memref<16x256xf32, #tpu.memory_space<vmem>>, vector<16x128xf32>,
    %c0_20 = arith.constant 0 : index
    %c128_21 = arith.constant 128 : index
    %31 = vector.load %arg8[%c0_20, %c128_21] : memref<16x256xf32, #tpu.memory_space<vmem>>, vector<16x128xf32>
    tpu.vector_store %arg8[%c0_20, %c128_21], %20 {strides = array<i32>} : memref<16x256xf32, #tpu.memory_space<vmem>>, vector<16x128xf32>,
    %c0_22 = arith.constant 0 : index
    %c0_23 = arith.constant 0 : index
    %32 = vector.load %arg9[%c0_22, %c0_23] : memref<16x256xf32, #tpu.memory_space<vmem>>, vector<16x128xf32>
    tpu.vector_store %arg9[%c0_22, %c0_23], %20 {strides = array<i32>} : memref<16x256xf32, #tpu.memory_space<vmem>>, vector<16x128xf32>,
    %c0_24 = arith.constant 0 : index
    %c128_25 = arith.constant 128 : index
    %33 = vector.load %arg9[%c0_24, %c128_25] : memref<16x256xf32, #tpu.memory_space<vmem>>, vector<16x128xf32>
    tpu.vector_store %arg9[%c0_24, %c128_25], %25 {strides = array<i32>} : memref<16x256xf32, #tpu.memory_space<vmem>>, vector<16x128xf32>,
    return
  }
  func.func @transform_0(%arg0: i32) -> (i32, i32) {
    %c0_i32 = arith.constant 0 : i32
    %c0_i32_0 = arith.constant 0 : i32
    return %arg0, %c0_i32 : i32, i32
  }
  func.func @transform_1(%arg0: i32) -> (i32, i32) {
    %c0_i32 = arith.constant 0 : i32
    %c0_i32_0 = arith.constant 0 : i32
    return %arg0, %c0_i32 : i32, i32
  }
  func.func @transform_2(%arg0: i32) -> (i32, i32) {
    %c0_i32 = arith.constant 0 : i32
    %c0_i32_0 = arith.constant 0 : i32
    return %arg0, %c0_i32 : i32, i32
  }
  func.func @transform_5(%arg0: i32) -> (i32, i32) {
    %c0_i32 = arith.constant 0 : i32
    %c0_i32_0 = arith.constant 0 : i32
    return %arg0, %c0_i32 : i32, i32
  }
  func.func @transform_6(%arg0: i32) -> (i32, i32) {
    %c0_i32 = arith.constant 0 : i32
    %c0_i32_0 = arith.constant 0 : i32
    return %arg0, %c0_i32 : i32, i32
  }
  func.func @transform_7(%arg0: i32) -> (i32, i32) {
    %c0_i32 = arith.constant 0 : i32
    %c0_i32_0 = arith.constant 0 : i32
    return %arg0, %c0_i32 : i32, i32
  }
  func.func @transform_8(%arg0: i32) -> (i32, i32) {
    %c0_i32 = arith.constant 0 : i32
    %c0_i32_0 = arith.constant 0 : i32
    return %arg0, %c0_i32 : i32, i32
  }
}

</mosaic_0001>

<llo_original>
// kernel: tpu_custom_call.1
$region0: #{tpu_custom_call.1}
  #allocation0 [shape = 'u32[]', space=smem, size = 0x4, offset = 0x4, fixed_abs, tag = 'smem constant byte address 0x4 - core index']
  #allocation1 [shape = 'u32[144,128]{1,0:T(1,128)}', space=vmem, size = 0x12000, scoped, tag = 'internal scratch']
  #allocation2 [shape = 'f32[16,128]{1,0:T(8,128)}', space=vmem, size = 0x2000, scoped, tag = 'scratch operand']
  #allocation3 [shape = 'f32[16,128]{1,0:T(8,128)}', space=vmem, size = 0x2000, scoped, tag = 'scratch operand']
  #allocation12 [shape = 's32[]', space=sflag, size = 0x4, offset = 0, fixed_abs, tag = 'sflag constant byte address 0x0 - dummy sync flag']
  #allocation14 [shape = 's32[]', space=sflag, size = 0x4, offset = 0, fixed_abs, tag = 'sflag constant byte address 0x0 - dummy sync flag']
  %s0 = inlined_call_operand.vmem [shape: s32[16,1], index: 0, kind: input, shape index: {}]
  %s1 = inlined_call_operand.vmem [shape: s32[16,1], index: 1, kind: input, shape index: {}]
  %s2 = inlined_call_operand.vmem [shape: s32[16,1], index: 2, kind: input, shape index: {}]
  %s3 = inlined_call_operand.vmem [shape: f32[16,128], index: 3, kind: input, shape index: {}]
  %s4 = inlined_call_operand.vmem [shape: f32[16,128], index: 4, kind: input, shape index: {}]
  %s5 = inlined_call_operand.hbm [shape: f32[16,256], index: 5, kind: output, shape index: {0}]
  %s6 = inlined_call_operand.hbm [shape: f32[16,256], index: 6, kind: output, shape index: {1}]
  %s7 = inlined_call_operand.hbm [shape: f32[16,256], index: 7, kind: output, shape index: {2}]
  %s8 = inlined_call_operand.hbm [shape: f32[16,256], index: 8, kind: output, shape index: {3}]
  %9 = xla_tuple %s5, %s6, %s7, %s8
  %s10 = sld [smem:[#allocation0]]
  $region120: #{tpu_custom_call.1} parent=0
    _
  %s12 = ssub.s32 1, %s10
  %s13 = scalar_select 0, %s12, %s10
  $region1: #{tpu_custom_call.1} parent=0
    #allocation4 [shape = 'u8[16384]{0}', space=vmem, size = 0x4000, scoped, tag = 'output window, operand 0, single buffered']
    #allocation5 [shape = 's32[1]{0}', space=sflag, size = 0x4, scoped, tag = 'scoped memory for tpu_custom_call.1']
    #allocation6 [shape = 'u8[16384]{0}', space=vmem, size = 0x4000, scoped, tag = 'output window, operand 1, single buffered']
    #allocation7 [shape = 's32[1]{0}', space=sflag, size = 0x4, scoped, tag = 'scoped memory for tpu_custom_call.1']
    #allocation8 [shape = 'u8[16384]{0}', space=vmem, size = 0x4000, scoped, tag = 'output window, operand 2, single buffered']
    #allocation9 [shape = 'u8[16384]{0}', space=vmem, size = 0x4000, scoped, tag = 'output window, operand 3, single buffered']
    #allocation10 [shape = 's32[1]{0}', space=sflag, size = 0x4, scoped, tag = 'scoped memory for tpu_custom_call.1']
    %14 = vsyncpa [#allocation5], 0
    %15 = vsyncpa [#allocation7], 0
    %16 = vsyncpa [#allocation10], 0
    // Predicated region
    $region2: #{tpu_custom_call.1} parent=1 // pred_check
      _
    $region3: #{tpu_custom_call.1} parent=1 // pred_check_branch
      %18 = sbr.rel (0) target = $region5
    $region4: #{tpu_custom_call.1} parent=1 // pred_region
      _
    $region5: #{tpu_custom_call.1} parent=1 // pred_fallthru
      _
    // Predicated region
    $region6: #{tpu_custom_call.1} parent=1 // pred_check
      _
    $region7: #{tpu_custom_call.1} parent=1 // pred_check_branch
      %20 = sbr.rel (0) target = $region9
    $region8: #{tpu_custom_call.1} parent=1 // pred_region
      _
    $region9: #{tpu_custom_call.1} parent=1 // pred_fallthru
      _
    // Predicated region
    $region10: #{tpu_custom_call.1} parent=1 // pred_check
      _
    $region11: #{tpu_custom_call.1} parent=1 // pred_check_branch
      %22 = sbr.rel (0) target = $region13
    $region12: #{tpu_custom_call.1} parent=1 // pred_region
      _
    $region13: #{tpu_custom_call.1} parent=1 // pred_fallthru
      _
    %p23 = scmp.eq.s32.totalorder 0, 0
    // Predicated region
    $region14: #{tpu_custom_call.1} parent=1 // pred_check
      %p24 = pneg %p23
    $region15: #{tpu_custom_call.1} parent=1 // pred_check_branch
      %26 = sbr.rel (%p24) target = $region17
    $region16: #{tpu_custom_call.1} parent=1 // pred_region
      $region18: #{tpu_custom_call.1} parent=16
        #allocation11 [shape = 's32[1]{0}', space=sflag, size = 0x4, scoped, tag = 'scoped memory for tpu_custom_call.1']
        %p28 = scmp.lt.u32.totalorder 16, 8
        %p29 = pneg %p28
        // Predicated region
        $region19: #{tpu_custom_call.1} parent=18 // pred_check
          _
        $region20: #{tpu_custom_call.1} parent=18 // pred_check_branch
          %31 = sbr.rel (%p28) target = $region22
        $region21: #{tpu_custom_call.1} parent=18 // pred_region
          %s46 = sand.u32 16, 7
          %p47 = scmp.eq.s32.totalorder %s46, 0
          // Predicated region
          $region34: #{tpu_custom_call.1} parent=21 // pred_check
            %p48 = pneg %p47
          $region35: #{tpu_custom_call.1} parent=21 // pred_check_branch
            %50 = sbr.rel (%p48) target = $region37
          $region36: #{tpu_custom_call.1} parent=21 // pred_region
            loop: start=0, step=1, limit=1
            $region38: #{tpu_custom_call.1} parent=36 // loop_pre_header
              _
            $region39: #{tpu_custom_call.1} parent=36 // loop_header
              %s52 = sphi 0, %s56
              %p53 = scmp.ge.s32.totalorder %s52, 1
              %s57 = sphi %s3, %s3
              %s58 = sphi [#allocation2], [#allocation2]
            $region40: #{tpu_custom_call.1} parent=36 // loop_header_branch
              %55 = sbr.rel (%p53) target = $region44
            $region41: #{tpu_custom_call.1} parent=36 // loop_body
              %v59 = vld [vmem:[%s57] sm:$0xff]
              %60 = vst [vmem:[%s58] sm:$0xff] %v59
              %v61 = vld [vmem:[%s57 + $0x8] sm:$0xff]
              %62 = vst [vmem:[%s58 + $0x8] sm:$0xff] %v61
            $region42: #{tpu_custom_call.1} parent=36 // loop_footer
              %s56 = sadd.s32 1, %s52
            $region43: #{tpu_custom_call.1} parent=36 // loop_footer_branch
              %51 = sbr.rel target = $region39
            $region44: #{tpu_custom_call.1} parent=36 // loop_exit
              _
          $region37: #{tpu_custom_call.1} parent=21 // pred_fallthru
            _
          %p63 = pneg %p47
          // Predicated region
          $region45: #{tpu_custom_call.1} parent=21 // pred_check
            _
          $region46: #{tpu_custom_call.1} parent=21 // pred_check_branch
            %65 = sbr.rel (%p47) target = $region48
          $region47: #{tpu_custom_call.1} parent=21 // pred_region
            %s66 = sand.u32 16, 7
          $region48: #{tpu_custom_call.1} parent=21 // pred_fallthru
            _
        $region22: #{tpu_custom_call.1} parent=18 // pred_fallthru
          _
        // Predicated region
        $region23: #{tpu_custom_call.1} parent=18 // pred_check
          %p32 = pneg %p28
        $region24: #{tpu_custom_call.1} parent=18 // pred_check_branch
          %34 = sbr.rel (%p32) target = $region26
        $region25: #{tpu_custom_call.1} parent=18 // pred_region
          %s35 = sshllo.u32 0, 16
          loop: start=0, step=1, limit=1
          $region27: #{tpu_custom_call.1} parent=25 // loop_pre_header
            _
          $region28: #{tpu_custom_call.1} parent=25 // loop_header
            %s37 = sphi 0, %s41
            %p38 = scmp.ge.s32.totalorder %s37, 1
            %s42 = sphi %s3, %s3
            %s43 = sphi [#allocation2], [#allocation2]
          $region29: #{tpu_custom_call.1} parent=25 // loop_header_branch
            %40 = sbr.rel (%p38) target = $region33
          $region30: #{tpu_custom_call.1} parent=25 // loop_body
            %v44 = vld [vmem:[%s42] sm:%s35]
            %45 = vst [vmem:[%s43] sm:%s35] %v44
          $region31: #{tpu_custom_call.1} parent=25 // loop_footer
            %s41 = sadd.s32 1, %s37
          $region32: #{tpu_custom_call.1} parent=25 // loop_footer_branch
            %36 = sbr.rel target = $region28
          $region33: #{tpu_custom_call.1} parent=25 // loop_exit
            _
        $region26: #{tpu_custom_call.1} parent=18 // pred_fallthru
          _
        // Predicated region
        $region49: #{tpu_custom_call.1} parent=18 // pred_check
          _
        $region50: #{tpu_custom_call.1} parent=18 // pred_check_branch
          %69 = sbr.rel (0) target = $region52
        $region51: #{tpu_custom_call.1} parent=18 // pred_region
          %70 = vsyncadd [#allocation11], 256
        $region52: #{tpu_custom_call.1} parent=18 // pred_fallthru
          _
        %s71 = smul.u32 16, 1
        %s72 = sshll.u32 %s71, 4
        %73 = dma.done [#allocation11], %s72
      $region53: #{tpu_custom_call.1} parent=16
        #allocation13 [shape = 's32[1]{0}', space=sflag, size = 0x4, scoped, tag = 'scoped memory for tpu_custom_call.1']
        %p75 = scmp.lt.u32.totalorder 16, 8
        %p76 = pneg %p75
        // Predicated region
        $region54: #{tpu_custom_call.1} parent=53 // pred_check
          _
        $region55: #{tpu_custom_call.1} parent=53 // pred_check_branch
          %78 = sbr.rel (%p75) target = $region57
        $region56: #{tpu_custom_call.1} parent=53 // pred_region
          %s93 = sand.u32 16, 7
          %p94 = scmp.eq.s32.totalorder %s93, 0
          // Predicated region
          $region69: #{tpu_custom_call.1} parent=56 // pred_check
            %p95 = pneg %p94
          $region70: #{tpu_custom_call.1} parent=56 // pred_check_branch
            %97 = sbr.rel (%p95) target = $region72
          $region71: #{tpu_custom_call.1} parent=56 // pred_region
            loop: start=0, step=1, limit=1
            $region73: #{tpu_custom_call.1} parent=71 // loop_pre_header
              _
            $region74: #{tpu_custom_call.1} parent=71 // loop_header
              %s99 = sphi 0, %s103
              %p100 = scmp.ge.s32.totalorder %s99, 1
              %s104 = sphi %s4, %s4
              %s105 = sphi [#allocation3], [#allocation3]
            $region75: #{tpu_custom_call.1} parent=71 // loop_header_branch
              %102 = sbr.rel (%p100) target = $region79
            $region76: #{tpu_custom_call.1} parent=71 // loop_body
              %v106 = vld [vmem:[%s104] sm:$0xff]
              %107 = vst [vmem:[%s105] sm:$0xff] %v106
              %v108 = vld [vmem:[%s104 + $0x8] sm:$0xff]
              %109 = vst [vmem:[%s105 + $0x8] sm:$0xff] %v108
            $region77: #{tpu_custom_call.1} parent=71 // loop_footer
              %s103 = sadd.s32 1, %s99
            $region78: #{tpu_custom_call.1} parent=71 // loop_footer_branch
              %98 = sbr.rel target = $region74
            $region79: #{tpu_custom_call.1} parent=71 // loop_exit
              _
          $region72: #{tpu_custom_call.1} parent=56 // pred_fallthru
            _
          %p110 = pneg %p94
          // Predicated region
          $region80: #{tpu_custom_call.1} parent=56 // pred_check
            _
          $region81: #{tpu_custom_call.1} parent=56 // pred_check_branch
            %112 = sbr.rel (%p94) target = $region83
          $region82: #{tpu_custom_call.1} parent=56 // pred_region
            %s113 = sand.u32 16, 7
          $region83: #{tpu_custom_call.1} parent=56 // pred_fallthru
            _
        $region57: #{tpu_custom_call.1} parent=53 // pred_fallthru
          _
        // Predicated region
        $region58: #{tpu_custom_call.1} parent=53 // pred_check
          %p79 = pneg %p75
        $region59: #{tpu_custom_call.1} parent=53 // pred_check_branch
          %81 = sbr.rel (%p79) target = $region61
        $region60: #{tpu_custom_call.1} parent=53 // pred_region
          %s82 = sshllo.u32 0, 16
          loop: start=0, step=1, limit=1
          $region62: #{tpu_custom_call.1} parent=60 // loop_pre_header
            _
          $region63: #{tpu_custom_call.1} parent=60 // loop_header
            %s84 = sphi 0, %s88
            %p85 = scmp.ge.s32.totalorder %s84, 1
            %s89 = sphi %s4, %s4
            %s90 = sphi [#allocation3], [#allocation3]
          $region64: #{tpu_custom_call.1} parent=60 // loop_header_branch
            %87 = sbr.rel (%p85) target = $region68
          $region65: #{tpu_custom_call.1} parent=60 // loop_body
            %v91 = vld [vmem:[%s89] sm:%s82]
            %92 = vst [vmem:[%s90] sm:%s82] %v91
          $region66: #{tpu_custom_call.1} parent=60 // loop_footer
            %s88 = sadd.s32 1, %s84
          $region67: #{tpu_custom_call.1} parent=60 // loop_footer_branch
            %83 = sbr.rel target = $region63
          $region68: #{tpu_custom_call.1} parent=60 // loop_exit
            _
        $region61: #{tpu_custom_call.1} parent=53 // pred_fallthru
          _
        // Predicated region
        $region84: #{tpu_custom_call.1} parent=53 // pred_check
          _
        $region85: #{tpu_custom_call.1} parent=53 // pred_check_branch
          %116 = sbr.rel (0) target = $region87
        $region86: #{tpu_custom_call.1} parent=53 // pred_region
          %117 = vsyncadd [#allocation13], 256
        $region87: #{tpu_custom_call.1} parent=53 // pred_fallthru
          _
        %s118 = smul.u32 16, 1
        %s119 = sshll.u32 %s118, 4
        %120 = dma.done [#allocation13], %s119
      %121 = vst [vmem:[#allocation2 + $0xf] sm:$0x1] 1.0
      %122 = vst [vmem:[#allocation3 + $0xf] sm:$0x1] 1.0
    $region17: #{tpu_custom_call.1} parent=1 // pred_fallthru
      _
    %v123 = vlaneseq
    %v124 = vand.u32 %v123, 127
    %v125 = vld [vmem:[%s0] sm:$0xff]
    %v126 = vld [vmem:[%s0 + $0x8] sm:$0xff]
    %127 = vset.pattern.permute.xlu0 0
    %128 = vperm.xlu0 %127, %v125
    %v129 = vpop.permute.xlu0 %128
    %130 = vset.pattern.permute.xlu0 0
    %131 = vperm.xlu0 %130, %v126
    %v132 = vpop.permute.xlu0 %131
    %vm133 = vcmp.eq.s32.totalorder %v129, %v124
    %vm134 = vcmp.eq.s32.totalorder %v132, %v124
    %v135 = vsel %vm133, 1, 0
    %v136 = vsel %vm134, 1, 0
    %v137 = vcvt.s32.f32 %v135
    %v138 = vcvt.s32.f32 %v136
    %v139 = vld [vmem:[%s1] sm:$0xff]
    %v140 = vld [vmem:[%s1 + $0x8] sm:$0xff]
    %141 = vset.pattern.permute.xlu0 0
    %142 = vperm.xlu0 %141, %v139
    %v143 = vpop.permute.xlu0 %142
    %144 = vset.pattern.permute.xlu0 0
    %145 = vperm.xlu0 %144, %v140
    %v146 = vpop.permute.xlu0 %145
    %vm147 = vcmp.eq.s32.totalorder %v143, %v124
    %vm148 = vcmp.eq.s32.totalorder %v146, %v124
    %v149 = vsel %vm147, 1, 0
    %v150 = vsel %vm148, 1, 0
    %v151 = vcvt.s32.f32 %v149
    %v152 = vcvt.s32.f32 %v150
    %v153 = vld [vmem:[%s2] sm:$0xff]
    %v154 = vld [vmem:[%s2 + $0x8] sm:$0xff]
    %155 = vset.pattern.permute.xlu0 0
    %156 = vperm.xlu0 %155, %v153
    %v157 = vpop.permute.xlu0 %156
    %158 = vset.pattern.permute.xlu0 0
    %159 = vperm.xlu0 %158, %v154
    %v160 = vpop.permute.xlu0 %159
    %vm161 = vcmp.eq.s32.totalorder %v157, %v124
    %vm162 = vcmp.eq.s32.totalorder %v160, %v124
    %v163 = vsel %vm161, 1, 0
    %v164 = vsel %vm162, 1, 0
    %v165 = vcvt.s32.f32 %v163
    %v166 = vcvt.s32.f32 %v164
    %v167 = vld [vmem:[#allocation2] sm:$0xff]
    %v168 = vld [vmem:[#allocation2 + $0x8] sm:$0xff]
    %vm169 = vcmask 130048
    %v171 = vsel %vm169, %v137, 0
    %v174 = vsel %vm169, %v138, 0
    %176 = vmatprep.subr.mxu0 0.0
    %v177 = vand.u32 %v167, 4294901760
    %178 = vmatpush1.msra.mxu0 %v177
    %179 = vmatprep.subr.mxu0 0.0
    %v180 = vand.u32 %v168, 4294901760
    %181 = vmatpush1.msra.mxu0 %v180
    %182 = vmatprep.subr.mxu0 0.0
    %183 = vmatpush1.msra.mxu0 0.0
    %184 = vmatprep.subr.mxu0 0.0
    %185 = vmatpush1.msra.mxu0 0.0
    %186 = vmatprep.subr.mxu0 0.0
    %187 = vmatpush1.msra.mxu0 0.0
    %188 = vmatprep.subr.mxu0 0.0
    %189 = vmatpush1.msra.mxu0 0.0
    %190 = vmatprep.subr.mxu0 0.0
    %191 = vmatpush1.msra.mxu0 0.0
    %192 = vmatprep.subr.mxu0 0.0
    %193 = vmatpush1.msra.mxu0 0.0
    %194 = vmatprep.subr.mxu0 0.0
    %195 = vmatpush1.msra.mxu0 0.0
    %196 = vmatprep.subr.mxu0 0.0
    %197 = vmatpush1.msra.mxu0 0.0
    %198 = vmatprep.subr.mxu0 0.0
    %199 = vmatpush1.msra.mxu0 0.0
    %200 = vmatprep.subr.mxu0 0.0
    %201 = vmatpush1.msra.mxu0 0.0
    %202 = vmatprep.subr.mxu0 0.0
    %203 = vmatpush1.msra.mxu0 0.0
    %204 = vmatprep.subr.mxu0 0.0
    %205 = vmatpush1.msra.mxu0 0.0
    %206 = vmatprep.subr.mxu0 0.0
    %207 = vmatpush1.msra.mxu0 0.0
    %208 = vmatprep.subr.mxu0 0.0
    %209 = vmatpush1.msra.mxu0 0.0
    %210 = vmatprep.subr.mxu0 0.0
    %211 = vmatpush1.msra.mxu0 0.0
    %212 = vmatprep.subr.mxu0 0.0
    %213 = vmatpush1.msra.mxu0 0.0
    %214 = vmatprep.subr.mxu0 0.0
    %215 = vmatpush1.msra.mxu0 0.0
    %216 = vmatprep.subr.mxu0 0.0
    %217 = vmatpush1.msra.mxu0 0.0
    %218 = vmatprep.subr.mxu0 0.0
    %219 = vmatpush1.msra.mxu0 0.0
    %220 = vmatprep.subr.mxu0 0.0
    %221 = vmatpush1.msra.mxu0 0.0
    %222 = vmatprep.subr.mxu0 0.0
    %223 = vmatpush1.msra.mxu0 0.0
    %224 = vmatprep.subr.mxu0 0.0
    %225 = vmatpush1.msra.mxu0 0.0
    %226 = vmatprep.subr.mxu0 0.0
    %227 = vmatpush1.msra.mxu0 0.0
    %228 = vmatprep.subr.mxu0 0.0
    %229 = vmatpush1.msra.mxu0 0.0
    %230 = vmatprep.subr.mxu0 0.0
    %231 = vmatpush1.msra.mxu0 0.0
    %232 = vmatprep.subr.mxu0 0.0
    %233 = vmatpush1.msra.mxu0 0.0
    %234 = vmatprep.subr.mxu0 0.0
    %235 = vmatpush1.msra.mxu0 0.0
    %236 = vmatprep.subr.mxu0 0.0
    %237 = vmatpush1.msra.mxu0 0.0
    %238 = vmatprep.subr.mxu0 0.0
    %239 = vmatpush1.msra.mxu0 0.0
    %240 = vmatprep.subr.mxu0 0.0
    %241 = vmatpush1.msra.mxu0 0.0
    %242 = vmatprep.mubr.f32.mxu0 0.0
    %v243 = vand.u32 %v171, 4294901760
    %v244 = vsub.f32 %v171, %v243
    %v245 = vand.u32 %v244, 4294901760
    %v246 = vsub.f32 %v244, %v245
    %v247 = vand.u32 %v246, 4294901760
    %248 = vmatmul.mubr.f32.gmra.mrb[0].mxu0 %v247
    %v249 = vpop.f32.mrb[0].mxu0
    %v250 = vadd.f32 0.0, %v249
    %v251 = vpop.f32.mrb[0].mxu0
    %252 = vmatprep.mubr.f32.mxu0 0.0
    %v253 = vand.u32 %v174, 4294901760
    %v254 = vsub.f32 %v174, %v253
    %v255 = vand.u32 %v254, 4294901760
    %v256 = vsub.f32 %v254, %v255
    %v257 = vand.u32 %v256, 4294901760
    %258 = vmatmul.mubr.f32.gmra.mrb[0].mxu0 %v257
    %v259 = vpop.f32.mrb[0].mxu0
    %v260 = vadd.f32 0.0, %v259
    %v261 = vpop.f32.mrb[0].mxu0
    %262 = vdwg.mxu0
    %263 = vmatprep.subr.mxu0 0.0
    %v264 = vand.u32 %v167, 4294901760
    %v265 = vsub.f32 %v167, %v264
    %v266 = vand.u32 %v265, 4294901760
    %v267 = vsub.f32 %v265, %v266
    %v268 = vand.u32 %v267, 4294901760
    %269 = vmatpush1.msra.mxu0 %v268
    %270 = vmatprep.subr.mxu0 0.0
    %v271 = vand.u32 %v168, 4294901760
    %v272 = vsub.f32 %v168, %v271
    %v273 = vand.u32 %v272, 4294901760
    %v274 = vsub.f32 %v272, %v273
    %v275 = vand.u32 %v274, 4294901760
    %276 = vmatpush1.msra.mxu0 %v275
    %277 = vmatprep.subr.mxu0 0.0
    %278 = vmatpush1.msra.mxu0 0.0
    %279 = vmatprep.subr.mxu0 0.0
    %280 = vmatpush1.msra.mxu0 0.0
    %281 = vmatprep.subr.mxu0 0.0
    %282 = vmatpush1.msra.mxu0 0.0
    %283 = vmatprep.subr.mxu0 0.0
    %284 = vmatpush1.msra.mxu0 0.0
    %285 = vmatprep.subr.mxu0 0.0
    %286 = vmatpush1.msra.mxu0 0.0
    %287 = vmatprep.subr.mxu0 0.0
    %288 = vmatpush1.msra.mxu0 0.0
    %289 = vmatprep.subr.mxu0 0.0
    %290 = vmatpush1.msra.mxu0 0.0
    %291 = vmatprep.subr.mxu0 0.0
    %292 = vmatpush1.msra.mxu0 0.0
    %293 = vmatprep.subr.mxu0 0.0
    %294 = vmatpush1.msra.mxu0 0.0
    %295 = vmatprep.subr.mxu0 0.0
    %296 = vmatpush1.msra.mxu0 0.0
    %297 = vmatprep.subr.mxu0 0.0
    %298 = vmatpush1.msra.mxu0 0.0
    %299 = vmatprep.subr.mxu0 0.0
    %300 = vmatpush1.msra.mxu0 0.0
    %301 = vmatprep.subr.mxu0 0.0
    %302 = vmatpush1.msra.mxu0 0.0
    %303 = vmatprep.subr.mxu0 0.0
    %304 = vmatpush1.msra.mxu0 0.0
    %305 = vmatprep.subr.mxu0 0.0
    %306 = vmatpush1.msra.mxu0 0.0
    %307 = vmatprep.subr.mxu0 0.0
    %308 = vmatpush1.msra.mxu0 0.0
    %309 = vmatprep.subr.mxu0 0.0
    %310 = vmatpush1.msra.mxu0 0.0
    %311 = vmatprep.subr.mxu0 0.0
    %312 = vmatpush1.msra.mxu0 0.0
    %313 = vmatprep.subr.mxu0 0.0
    %314 = vmatpush1.msra.mxu0 0.0
    %315 = vmatprep.subr.mxu0 0.0
    %316 = vmatpush1.msra.mxu0 0.0
    %317 = vmatprep.subr.mxu0 0.0
    %318 = vmatpush1.msra.mxu0 0.0
    %319 = vmatprep.subr.mxu0 0.0
    %320 = vmatpush1.msra.mxu0 0.0
    %321 = vmatprep.subr.mxu0 0.0
    %322 = vmatpush1.msra.mxu0 0.0
    %323 = vmatprep.subr.mxu0 0.0
    %324 = vmatpush1.msra.mxu0 0.0
    %325 = vmatprep.subr.mxu0 0.0
    %326 = vmatpush1.msra.mxu0 0.0
    %327 = vmatprep.subr.mxu0 0.0
    %328 = vmatpush1.msra.mxu0 0.0
    %329 = vmatprep.subr.mxu0 0.0
    %330 = vmatpush1.msra.mxu0 0.0
    %331 = vmatprep.subr.mxu0 0.0
    %332 = vmatpush1.msra.mxu0 0.0
    %333 = vmatprep.subr.mxu0 0.0
    %334 = vmatpush1.msra.mxu0 0.0
    %335 = vmatprep.subr.mxu0 0.0
    %336 = vmatpush1.msra.mxu0 0.0
    %337 = vmatprep.mubr.f32.mxu0 0.0
    %v338 = vand.u32 %v171, 4294901760
    %339 = vmatmul.mubr.f32.gmra.mrb[0].mxu0 %v338
    %v340 = vpop.f32.mrb[0].mxu0
    %v341 = vadd.f32 %v250, %v340
    %v342 = vpop.f32.mrb[0].mxu0
    %343 = vmatprep.mubr.f32.mxu0 0.0
    %v344 = vand.u32 %v174, 4294901760
    %345 = vmatmul.mubr.f32.gmra.mrb[0].mxu0 %v344
    %v346 = vpop.f32.mrb[0].mxu0
    %v347 = vadd.f32 %v260, %v346
    %v348 = vpop.f32.mrb[0].mxu0
    %349 = vdwg.mxu0
    %350 = vmatprep.subr.mxu0 0.0
    %v351 = vand.u32 %v167, 4294901760
    %v352 = vsub.f32 %v167, %v351
    %353 = vmatpush1.msra.mxu0 %v352
    %354 = vmatprep.subr.mxu0 0.0
    %v355 = vand.u32 %v168, 4294901760
    %v356 = vsub.f32 %v168, %v355
    %357 = vmatpush1.msra.mxu0 %v356
    %358 = vmatprep.subr.mxu0 0.0
    %359 = vmatpush1.msra.mxu0 0.0
    %360 = vmatprep.subr.mxu0 0.0
    %361 = vmatpush1.msra.mxu0 0.0
    %362 = vmatprep.subr.mxu0 0.0
    %363 = vmatpush1.msra.mxu0 0.0
    %364 = vmatprep.subr.mxu0 0.0
    %365 = vmatpush1.msra.mxu0 0.0
    %366 = vmatprep.subr.mxu0 0.0
    %367 = vmatpush1.msra.mxu0 0.0
    %368 = vmatprep.subr.mxu0 0.0
    %369 = vmatpush1.msra.mxu0 0.0
    %370 = vmatprep.subr.mxu0 0.0
    %371 = vmatpush1.msra.mxu0 0.0
    %372 = vmatprep.subr.mxu0 0.0
    %373 = vmatpush1.msra.mxu0 0.0
    %374 = vmatprep.subr.mxu0 0.0
    %375 = vmatpush1.msra.mxu0 0.0
    %376 = vmatprep.subr.mxu0 0.0
    %377 = vmatpush1.msra.mxu0 0.0
    %378 = vmatprep.subr.mxu0 0.0
    %379 = vmatpush1.msra.mxu0 0.0
    %380 = vmatprep.subr.mxu0 0.0
    %381 = vmatpush1.msra.mxu0 0.0
    %382 = vmatprep.subr.mxu0 0.0
    %383 = vmatpush1.msra.mxu0 0.0
    %384 = vmatprep.subr.mxu0 0.0
    %385 = vmatpush1.msra.mxu0 0.0
    %386 = vmatprep.subr.mxu0 0.0
    %387 = vmatpush1.msra.mxu0 0.0
    %388 = vmatprep.subr.mxu0 0.0
    %389 = vmatpush1.msra.mxu0 0.0
    %390 = vmatprep.subr.mxu0 0.0
    %391 = vmatpush1.msra.mxu0 0.0
    %392 = vmatprep.subr.mxu0 0.0
    %393 = vmatpush1.msra.mxu0 0.0
    %394 = vmatprep.subr.mxu0 0.0
    %395 = vmatpush1.msra.mxu0 0.0
    %396 = vmatprep.subr.mxu0 0.0
    %397 = vmatpush1.msra.mxu0 0.0
    %398 = vmatprep.subr.mxu0 0.0
    %399 = vmatpush1.msra.mxu0 0.0
    %400 = vmatprep.subr.mxu0 0.0
    %401 = vmatpush1.msra.mxu0 0.0
    %402 = vmatprep.subr.mxu0 0.0
    %403 = vmatpush1.msra.mxu0 0.0
    %404 = vmatprep.subr.mxu0 0.0
    %405 = vmatpush1.msra.mxu0 0.0
    %406 = vmatprep.subr.mxu0 0.0
    %407 = vmatpush1.msra.mxu0 0.0
    %408 = vmatprep.subr.mxu0 0.0
    %409 = vmatpush1.msra.mxu0 0.0
    %410 = vmatprep.subr.mxu0 0.0
    %411 = vmatpush1.msra.mxu0 0.0
    %412 = vmatprep.subr.mxu0 0.0
    %413 = vmatpush1.msra.mxu0 0.0
    %414 = vmatprep.subr.mxu0 0.0
    %415 = vmatpush1.msra.mxu0 0.0
    %416 = vmatprep.subr.mxu0 0.0
    %417 = vmatpush1.msra.mxu0 0.0
    %418 = vmatprep.mubr.f32.mxu0 0.0
    %v419 = vand.u32 %v171, 4294901760
    %v420 = vsub.f32 %v171, %v419
    %421 = vmatmul.mubr.f32.gmra.mrb[0].mxu0 %v420
    %v422 = vpop.f32.mrb[0].mxu0
    %v423 = vadd.f32 %v341, %v422
    %v424 = vpop.f32.mrb[0].mxu0
    %425 = vmatprep.mubr.f32.mxu0 0.0
    %v426 = vand.u32 %v174, 4294901760
    %v427 = vsub.f32 %v174, %v426
    %428 = vmatmul.mubr.f32.gmra.mrb[0].mxu0 %v427
    %v429 = vpop.f32.mrb[0].mxu0
    %v430 = vadd.f32 %v347, %v429
    %v431 = vpop.f32.mrb[0].mxu0
    %432 = vdwg.mxu0
    %433 = vmatprep.subr.mxu0 0.0
    %v434 = vand.u32 %v167, 4294901760
    %435 = vmatpush1.msra.mxu0 %v434
    %436 = vmatprep.subr.mxu0 0.0
    %v437 = vand.u32 %v168, 4294901760
    %438 = vmatpush1.msra.mxu0 %v437
    %439 = vmatprep.subr.mxu0 0.0
    %440 = vmatpush1.msra.mxu0 0.0
    %441 = vmatprep.subr.mxu0 0.0
    %442 = vmatpush1.msra.mxu0 0.0
    %443 = vmatprep.subr.mxu0 0.0
    %444 = vmatpush1.msra.mxu0 0.0
    %445 = vmatprep.subr.mxu0 0.0
    %446 = vmatpush1.msra.mxu0 0.0
    %447 = vmatprep.subr.mxu0 0.0
    %448 = vmatpush1.msra.mxu0 0.0
    %449 = vmatprep.subr.mxu0 0.0
    %450 = vmatpush1.msra.mxu0 0.0
    %451 = vmatprep.subr.mxu0 0.0
    %452 = vmatpush1.msra.mxu0 0.0
    %453 = vmatprep.subr.mxu0 0.0
    %454 = vmatpush1.msra.mxu0 0.0
    %455 = vmatprep.subr.mxu0 0.0
    %456 = vmatpush1.msra.mxu0 0.0
    %457 = vmatprep.subr.mxu0 0.0
    %458 = vmatpush1.msra.mxu0 0.0
    %459 = vmatprep.subr.mxu0 0.0
    %460 = vmatpush1.msra.mxu0 0.0
    %461 = vmatprep.subr.mxu0 0.0
    %462 = vmatpush1.msra.mxu0 0.0
    %463 = vmatprep.subr.mxu0 0.0
    %464 = vmatpush1.msra.mxu0 0.0
    %465 = vmatprep.subr.mxu0 0.0
    %466 = vmatpush1.msra.mxu0 0.0
    %467 = vmatprep.subr.mxu0 0.0
    %468 = vmatpush1.msra.mxu0 0.0
    %469 = vmatprep.subr.mxu0 0.0
    %470 = vmatpush1.msra.mxu0 0.0
    %471 = vmatprep.subr.mxu0 0.0
    %472 = vmatpush1.msra.mxu0 0.0
    %473 = vmatprep.subr.mxu0 0.0
    %474 = vmatpush1.msra.mxu0 0.0
    %475 = vmatprep.subr.mxu0 0.0
    %476 = vmatpush1.msra.mxu0 0.0
    %477 = vmatprep.subr.mxu0 0.0
    %478 = vmatpush1.msra.mxu0 0.0
    %479 = vmatprep.subr.mxu0 0.0
    %480 = vmatpush1.msra.mxu0 0.0
    %481 = vmatprep.subr.mxu0 0.0
    %482 = vmatpush1.msra.mxu0 0.0
    %483 = vmatprep.subr.mxu0 0.0
    %484 = vmatpush1.msra.mxu0 0.0
    %485 = vmatprep.subr.mxu0 0.0
    %486 = vmatpush1.msra.mxu0 0.0
    %487 = vmatprep.subr.mxu0 0.0
    %488 = vmatpush1.msra.mxu0 0.0
    %489 = vmatprep.subr.mxu0 0.0
    %490 = vmatpush1.msra.mxu0 0.0
    %491 = vmatprep.subr.mxu0 0.0
    %492 = vmatpush1.msra.mxu0 0.0
    %493 = vmatprep.subr.mxu0 0.0
    %494 = vmatpush1.msra.mxu0 0.0
    %495 = vmatprep.subr.mxu0 0.0
    %496 = vmatpush1.msra.mxu0 0.0
    %497 = vmatprep.subr.mxu0 0.0
    %498 = vmatpush1.msra.mxu0 0.0
    %499 = vmatprep.mubr.f32.mxu0 0.0
    %v500 = vand.u32 %v171, 4294901760
    %v501 = vsub.f32 %v171, %v500
    %v502 = vand.u32 %v501, 4294901760
    %503 = vmatmul.mubr.f32.gmra.mrb[0].mxu0 %v502
    %v504 = vpop.f32.mrb[0].mxu0
    %v505 = vadd.f32 %v423, %v504
    %v506 = vpop.f32.mrb[0].mxu0
    %507 = vmatprep.mubr.f32.mxu0 0.0
    %v508 = vand.u32 %v174, 4294901760
    %v509 = vsub.f32 %v174, %v508
    %v510 = vand.u32 %v509, 4294901760
    %511 = vmatmul.mubr.f32.gmra.mrb[0].mxu0 %v510
    %v512 = vpop.f32.mrb[0].mxu0
    %v513 = vadd.f32 %v430, %v512
    %v514 = vpop.f32.mrb[0].mxu0
    %515 = vdwg.mxu0
    %516 = vmatprep.subr.mxu0 0.0
    %v517 = vand.u32 %v167, 4294901760
    %v518 = vsub.f32 %v167, %v517
    %v519 = vand.u32 %v518, 4294901760
    %520 = vmatpush1.msra.mxu0 %v519
    %521 = vmatprep.subr.mxu0 0.0
    %v522 = vand.u32 %v168, 4294901760
    %v523 = vsub.f32 %v168, %v522
    %v524 = vand.u32 %v523, 4294901760
    %525 = vmatpush1.msra.mxu0 %v524
    %526 = vmatprep.subr.mxu0 0.0
    %527 = vmatpush1.msra.mxu0 0.0
    %528 = vmatprep.subr.mxu0 0.0
    %529 = vmatpush1.msra.mxu0 0.0
    %530 = vmatprep.subr.mxu0 0.0
    %531 = vmatpush1.msra.mxu0 0.0
    %532 = vmatprep.subr.mxu0 0.0
    %533 = vmatpush1.msra.mxu0 0.0
    %534 = vmatprep.subr.mxu0 0.0
    %535 = vmatpush1.msra.mxu0 0.0
    %536 = vmatprep.subr.mxu0 0.0
    %537 = vmatpush1.msra.mxu0 0.0
    %538 = vmatprep.subr.mxu0 0.0
    %539 = vmatpush1.msra.mxu0 0.0
    %540 = vmatprep.subr.mxu0 0.0
    %541 = vmatpush1.msra.mxu0 0.0
    %542 = vmatprep.subr.mxu0 0.0
    %543 = vmatpush1.msra.mxu0 0.0
    %544 = vmatprep.subr.mxu0 0.0
    %545 = vmatpush1.msra.mxu0 0.0
    %546 = vmatprep.subr.mxu0 0.0
    %547 = vmatpush1.msra.mxu0 0.0
    %548 = vmatprep.subr.mxu0 0.0
    %549 = vmatpush1.msra.mxu0 0.0
    %550 = vmatprep.subr.mxu0 0.0
    %551 = vmatpush1.msra.mxu0 0.0
    %552 = vmatprep.subr.mxu0 0.0
    %553 = vmatpush1.msra.mxu0 0.0
    %554 = vmatprep.subr.mxu0 0.0
    %555 = vmatpush1.msra.mxu0 0.0
    %556 = vmatprep.subr.mxu0 0.0
    %557 = vmatpush1.msra.mxu0 0.0
    %558 = vmatprep.subr.mxu0 0.0
    %559 = vmatpush1.msra.mxu0 0.0
    %560 = vmatprep.subr.mxu0 0.0
    %561 = vmatpush1.msra.mxu0 0.0
    %562 = vmatprep.subr.mxu0 0.0
    %563 = vmatpush1.msra.mxu0 0.0
    %564 = vmatprep.subr.mxu0 0.0
    %565 = vmatpush1.msra.mxu0 0.0
    %566 = vmatprep.subr.mxu0 0.0
    %567 = vmatpush1.msra.mxu0 0.0
    %568 = vmatprep.subr.mxu0 0.0
    %569 = vmatpush1.msra.mxu0 0.0
    %570 = vmatprep.subr.mxu0 0.0
    %571 = vmatpush1.msra.mxu0 0.0
    %572 = vmatprep.subr.mxu0 0.0
    %573 = vmatpush1.msra.mxu0 0.0
    %574 = vmatprep.subr.mxu0 0.0
    %575 = vmatpush1.msra.mxu0 0.0
    %576 = vmatprep.subr.mxu0 0.0
    %577 = vmatpush1.msra.mxu0 0.0
    %578 = vmatprep.subr.mxu0 0.0
    %579 = vmatpush1.msra.mxu0 0.0
    %580 = vmatprep.subr.mxu0 0.0
    %581 = vmatpush1.msra.mxu0 0.0
    %582 = vmatprep.subr.mxu0 0.0
    %583 = vmatpush1.msra.mxu0 0.0
    %584 = vmatprep.subr.mxu0 0.0
    %585 = vmatpush1.msra.mxu0 0.0
    %586 = vmatprep.mubr.f32.mxu0 0.0
    %v587 = vand.u32 %v171, 4294901760
    %588 = vmatmul.mubr.f32.gmra.mrb[0].mxu0 %v587
    %v589 = vpop.f32.mrb[0].mxu0
    %v590 = vadd.f32 %v505, %v589
    %v591 = vpop.f32.mrb[0].mxu0
    %592 = vmatprep.mubr.f32.mxu0 0.0
    %v593 = vand.u32 %v174, 4294901760
    %594 = vmatmul.mubr.f32.gmra.mrb[0].mxu0 %v593
    %v595 = vpop.f32.mrb[0].mxu0
    %v596 = vadd.f32 %v513, %v595
    %v597 = vpop.f32.mrb[0].mxu0
    %598 = vdwg.mxu0
    %599 = vmatprep.subr.mxu0 0.0
    %v600 = vand.u32 %v167, 4294901760
    %601 = vmatpush1.msra.mxu0 %v600
    %602 = vmatprep.subr.mxu0 0.0
    %v603 = vand.u32 %v168, 4294901760
    %604 = vmatpush1.msra.mxu0 %v603
    %605 = vmatprep.subr.mxu0 0.0
    %606 = vmatpush1.msra.mxu0 0.0
    %607 = vmatprep.subr.mxu0 0.0
    %608 = vmatpush1.msra.mxu0 0.0
    %609 = vmatprep.subr.mxu0 0.0
    %610 = vmatpush1.msra.mxu0 0.0
    %611 = vmatprep.subr.mxu0 0.0
    %612 = vmatpush1.msra.mxu0 0.0
    %613 = vmatprep.subr.mxu0 0.0
    %614 = vmatpush1.msra.mxu0 0.0
    %615 = vmatprep.subr.mxu0 0.0
    %616 = vmatpush1.msra.mxu0 0.0
    %617 = vmatprep.subr.mxu0 0.0
    %618 = vmatpush1.msra.mxu0 0.0
    %619 = vmatprep.subr.mxu0 0.0
    %620 = vmatpush1.msra.mxu0 0.0
    %621 = vmatprep.subr.mxu0 0.0
    %622 = vmatpush1.msra.mxu0 0.0
    %623 = vmatprep.subr.mxu0 0.0
    %624 = vmatpush1.msra.mxu0 0.0
    %625 = vmatprep.subr.mxu0 0.0
    %626 = vmatpush1.msra.mxu0 0.0
    %627 = vmatprep.subr.mxu0 0.0
    %628 = vmatpush1.msra.mxu0 0.0
    %629 = vmatprep.subr.mxu0 0.0
    %630 = vmatpush1.msra.mxu0 0.0
    %631 = vmatprep.subr.mxu0 0.0
    %632 = vmatpush1.msra.mxu0 0.0
    %633 = vmatprep.subr.mxu0 0.0
    %634 = vmatpush1.msra.mxu0 0.0
    %635 = vmatprep.subr.mxu0 0.0
    %636 = vmatpush1.msra.mxu0 0.0
    %637 = vmatprep.subr.mxu0 0.0
    %638 = vmatpush1.msra.mxu0 0.0
    %639 = vmatprep.subr.mxu0 0.0
    %640 = vmatpush1.msra.mxu0 0.0
    %641 = vmatprep.subr.mxu0 0.0
    %642 = vmatpush1.msra.mxu0 0.0
    %643 = vmatprep.subr.mxu0 0.0
    %644 = vmatpush1.msra.mxu0 0.0
    %645 = vmatprep.subr.mxu0 0.0
    %646 = vmatpush1.msra.mxu0 0.0
    %647 = vmatprep.subr.mxu0 0.0
    %648 = vmatpush1.msra.mxu0 0.0
    %649 = vmatprep.subr.mxu0 0.0
    %650 = vmatpush1.msra.mxu0 0.0
    %651 = vmatprep.subr.mxu0 0.0
    %652 = vmatpush1.msra.mxu0 0.0
    %653 = vmatprep.subr.mxu0 0.0
    %654 = vmatpush1.msra.mxu0 0.0
    %655 = vmatprep.subr.mxu0 0.0
    %656 = vmatpush1.msra.mxu0 0.0
    %657 = vmatprep.subr.mxu0 0.0
    %658 = vmatpush1.msra.mxu0 0.0
    %659 = vmatprep.subr.mxu0 0.0
    %660 = vmatpush1.msra.mxu0 0.0
    %661 = vmatprep.subr.mxu0 0.0
    %662 = vmatpush1.msra.mxu0 0.0
    %663 = vmatprep.subr.mxu0 0.0
    %664 = vmatpush1.msra.mxu0 0.0
    %665 = vmatprep.mubr.f32.mxu0 0.0
    %v666 = vand.u32 %v171, 4294901760
    %667 = vmatmul.mubr.f32.gmra.mrb[0].mxu0 %v666
    %v668 = vpop.f32.mrb[0].mxu0
    %v669 = vadd.f32 %v590, %v668
    %v670 = vpop.f32.mrb[0].mxu0
    %671 = vmatprep.mubr.f32.mxu0 0.0
    %v672 = vand.u32 %v174, 4294901760
    %673 = vmatmul.mubr.f32.gmra.mrb[0].mxu0 %v672
    %v674 = vpop.f32.mrb[0].mxu0
    %v675 = vadd.f32 %v596, %v674
    %v676 = vpop.f32.mrb[0].mxu0
    %677 = vdwg.mxu0
    %v678 = vld [vmem:[#allocation3] sm:$0xff]
    %v679 = vld [vmem:[#allocation3 + $0x8] sm:$0xff]
    %v681 = vsel %vm169, %v151, 0
    %v684 = vsel %vm169, %v152, 0
    %v687 = vsel %vm169, %v165, 0
    %v690 = vsel %vm169, %v166, 0
    %692 = vmatprep.subr.mxu0 0.0
    %v693 = vand.u32 %v678, 4294901760
    %694 = vmatpush1.msra.mxu0 %v693
    %695 = vmatprep.subr.mxu0 0.0
    %v696 = vand.u32 %v679, 4294901760
    %697 = vmatpush1.msra.mxu0 %v696
    %698 = vmatprep.subr.mxu0 0.0
    %699 = vmatpush1.msra.mxu0 0.0
    %700 = vmatprep.subr.mxu0 0.0
    %701 = vmatpush1.msra.mxu0 0.0
    %702 = vmatprep.subr.mxu0 0.0
    %703 = vmatpush1.msra.mxu0 0.0
    %704 = vmatprep.subr.mxu0 0.0
    %705 = vmatpush1.msra.mxu0 0.0
    %706 = vmatprep.subr.mxu0 0.0
    %707 = vmatpush1.msra.mxu0 0.0
    %708 = vmatprep.subr.mxu0 0.0
    %709 = vmatpush1.msra.mxu0 0.0
    %710 = vmatprep.subr.mxu0 0.0
    %711 = vmatpush1.msra.mxu0 0.0
    %712 = vmatprep.subr.mxu0 0.0
    %713 = vmatpush1.msra.mxu0 0.0
    %714 = vmatprep.subr.mxu0 0.0
    %715 = vmatpush1.msra.mxu0 0.0
    %716 = vmatprep.subr.mxu0 0.0
    %717 = vmatpush1.msra.mxu0 0.0
    %718 = vmatprep.subr.mxu0 0.0
    %719 = vmatpush1.msra.mxu0 0.0
    %720 = vmatprep.subr.mxu0 0.0
    %721 = vmatpush1.msra.mxu0 0.0
    %722 = vmatprep.subr.mxu0 0.0
    %723 = vmatpush1.msra.mxu0 0.0
    %724 = vmatprep.subr.mxu0 0.0
    %725 = vmatpush1.msra.mxu0 0.0
    %726 = vmatprep.subr.mxu0 0.0
    %727 = vmatpush1.msra.mxu0 0.0
    %728 = vmatprep.subr.mxu0 0.0
    %729 = vmatpush1.msra.mxu0 0.0
    %730 = vmatprep.subr.mxu0 0.0
    %731 = vmatpush1.msra.mxu0 0.0
    %732 = vmatprep.subr.mxu0 0.0
    %733 = vmatpush1.msra.mxu0 0.0
    %734 = vmatprep.subr.mxu0 0.0
    %735 = vmatpush1.msra.mxu0 0.0
    %736 = vmatprep.subr.mxu0 0.0
    %737 = vmatpush1.msra.mxu0 0.0
    %738 = vmatprep.subr.mxu0 0.0
    %739 = vmatpush1.msra.mxu0 0.0
    %740 = vmatprep.subr.mxu0 0.0
    %741 = vmatpush1.msra.mxu0 0.0
    %742 = vmatprep.subr.mxu0 0.0
    %743 = vmatpush1.msra.mxu0 0.0
    %744 = vmatprep.subr.mxu0 0.0
    %745 = vmatpush1.msra.mxu0 0.0
    %746 = vmatprep.subr.mxu0 0.0
    %747 = vmatpush1.msra.mxu0 0.0
    %748 = vmatprep.subr.mxu0 0.0
    %749 = vmatpush1.msra.mxu0 0.0
    %750 = vmatprep.subr.mxu0 0.0
    %751 = vmatpush1.msra.mxu0 0.0
    %752 = vmatprep.subr.mxu0 0.0
    %753 = vmatpush1.msra.mxu0 0.0
    %754 = vmatprep.subr.mxu0 0.0
    %755 = vmatpush1.msra.mxu0 0.0
    %756 = vmatprep.subr.mxu0 0.0
    %757 = vmatpush1.msra.mxu0 0.0
    %758 = vmatprep.mubr.f32.mxu0 0.0
    %v759 = vand.u32 %v681, 4294901760
    %v760 = vsub.f32 %v681, %v759
    %v761 = vand.u32 %v760, 4294901760
    %v762 = vsub.f32 %v760, %v761
    %v763 = vand.u32 %v762, 4294901760
    %764 = vmatmul.mubr.f32.gmra.mrb[0].mxu0 %v763
    %v765 = vpop.f32.mrb[0].mxu0
    %v766 = vadd.f32 0.0, %v765
    %v767 = vpop.f32.mrb[0].mxu0
    %768 = vmatprep.mubr.f32.mxu0 0.0
    %v769 = vand.u32 %v684, 4294901760
    %v770 = vsub.f32 %v684, %v769
    %v771 = vand.u32 %v770, 4294901760
    %v772 = vsub.f32 %v770, %v771
    %v773 = vand.u32 %v772, 4294901760
    %774 = vmatmul.mubr.f32.gmra.mrb[0].mxu0 %v773
    %v775 = vpop.f32.mrb[0].mxu0
    %v776 = vadd.f32 0.0, %v775
    %v777 = vpop.f32.mrb[0].mxu0
    %778 = vmatprep.mubr.f32.mxu0 0.0
    %v779 = vand.u32 %v687, 4294901760
    %v780 = vsub.f32 %v687, %v779
    %v781 = vand.u32 %v780, 4294901760
    %v782 = vsub.f32 %v780, %v781
    %v783 = vand.u32 %v782, 4294901760
    %784 = vmatmul.mubr.f32.gmra.mrb[0].mxu0 %v783
    %v785 = vpop.f32.mrb[0].mxu0
    %v786 = vadd.f32 0.0, %v785
    %v787 = vpop.f32.mrb[0].mxu0
    %788 = vmatprep.mubr.f32.mxu0 0.0
    %v789 = vand.u32 %v690, 4294901760
    %v790 = vsub.f32 %v690, %v789
    %v791 = vand.u32 %v790, 4294901760
    %v792 = vsub.f32 %v790, %v791
    %v793 = vand.u32 %v792, 4294901760
    %794 = vmatmul.mubr.f32.gmra.mrb[0].mxu0 %v793
    %v795 = vpop.f32.mrb[0].mxu0
    %v796 = vadd.f32 0.0, %v795
    %v797 = vpop.f32.mrb[0].mxu0
    %798 = vdwg.mxu0
    %799 = vmatprep.subr.mxu0 0.0
    %v800 = vand.u32 %v678, 4294901760
    %v801 = vsub.f32 %v678, %v800
    %v802 = vand.u32 %v801, 4294901760
    %v803 = vsub.f32 %v801, %v802
    %v804 = vand.u32 %v803, 4294901760
    %805 = vmatpush1.msra.mxu0 %v804
    %806 = vmatprep.subr.mxu0 0.0
    %v807 = vand.u32 %v679, 4294901760
    %v808 = vsub.f32 %v679, %v807
    %v809 = vand.u32 %v808, 4294901760
    %v810 = vsub.f32 %v808, %v809
    %v811 = vand.u32 %v810, 4294901760
    %812 = vmatpush1.msra.mxu0 %v811
    %813 = vmatprep.subr.mxu0 0.0
    %814 = vmatpush1.msra.mxu0 0.0
    %815 = vmatprep.subr.mxu0 0.0
    %816 = vmatpush1.msra.mxu0 0.0
    %817 = vmatprep.subr.mxu0 0.0
    %818 = vmatpush1.msra.mxu0 0.0
    %819 = vmatprep.subr.mxu0 0.0
    %820 = vmatpush1.msra.mxu0 0.0
    %821 = vmatprep.subr.mxu0 0.0
    %822 = vmatpush1.msra.mxu0 0.0
    %823 = vmatprep.subr.mxu0 0.0
    %824 = vmatpush1.msra.mxu0 0.0
    %825 = vmatprep.subr.mxu0 0.0
    %826 = vmatpush1.msra.mxu0 0.0
    %827 = vmatprep.subr.mxu0 0.0
    %828 = vmatpush1.msra.mxu0 0.0
    %829 = vmatprep.subr.mxu0 0.0
    %830 = vmatpush1.msra.mxu0 0.0
    %831 = vmatprep.subr.mxu0 0.0
    %832 = vmatpush1.msra.mxu0 0.0
    %833 = vmatprep.subr.mxu0 0.0
    %834 = vmatpush1.msra.mxu0 0.0
    %835 = vmatprep.subr.mxu0 0.0
    %836 = vmatpush1.msra.mxu0 0.0
    %837 = vmatprep.subr.mxu0 0.0
    %838 = vmatpush1.msra.mxu0 0.0
    %839 = vmatprep.subr.mxu0 0.0
    %840 = vmatpush1.msra.mxu0 0.0
    %841 = vmatprep.subr.mxu0 0.0
    %842 = vmatpush1.msra.mxu0 0.0
    %843 = vmatprep.subr.mxu0 0.0
    %844 = vmatpush1.msra.mxu0 0.0
    %845 = vmatprep.subr.mxu0 0.0
    %846 = vmatpush1.msra.mxu0 0.0
    %847 = vmatprep.subr.mxu0 0.0
    %848 = vmatpush1.msra.mxu0 0.0
    %849 = vmatprep.subr.mxu0 0.0
    %850 = vmatpush1.msra.mxu0 0.0
    %851 = vmatprep.subr.mxu0 0.0
    %852 = vmatpush1.msra.mxu0 0.0
    %853 = vmatprep.subr.mxu0 0.0
    %854 = vmatpush1.msra.mxu0 0.0
    %855 = vmatprep.subr.mxu0 0.0
    %856 = vmatpush1.msra.mxu0 0.0
    %857 = vmatprep.subr.mxu0 0.0
    %858 = vmatpush1.msra.mxu0 0.0
    %859 = vmatprep.subr.mxu0 0.0
    %860 = vmatpush1.msra.mxu0 0.0
    %861 = vmatprep.subr.mxu0 0.0
    %862 = vmatpush1.msra.mxu0 0.0
    %863 = vmatprep.subr.mxu0 0.0
    %864 = vmatpush1.msra.mxu0 0.0
    %865 = vmatprep.subr.mxu0 0.0
    %866 = vmatpush1.msra.mxu0 0.0
    %867 = vmatprep.subr.mxu0 0.0
    %868 = vmatpush1.msra.mxu0 0.0
    %869 = vmatprep.subr.mxu0 0.0
    %870 = vmatpush1.msra.mxu0 0.0
    %871 = vmatprep.subr.mxu0 0.0
    %872 = vmatpush1.msra.mxu0 0.0
    %873 = vmatprep.mubr.f32.mxu0 0.0
    %v874 = vand.u32 %v681, 4294901760
    %875 = vmatmul.mubr.f32.gmra.mrb[0].mxu0 %v874
    %v876 = vpop.f32.mrb[0].mxu0
    %v877 = vadd.f32 %v766, %v876
    %v878 = vpop.f32.mrb[0].mxu0
    %879 = vmatprep.mubr.f32.mxu0 0.0
    %v880 = vand.u32 %v684, 4294901760
    %881 = vmatmul.mubr.f32.gmra.mrb[0].mxu0 %v880
    %v882 = vpop.f32.mrb[0].mxu0
    %v883 = vadd.f32 %v776, %v882
    %v884 = vpop.f32.mrb[0].mxu0
    %885 = vmatprep.mubr.f32.mxu0 0.0
    %v886 = vand.u32 %v687, 4294901760
    %887 = vmatmul.mubr.f32.gmra.mrb[0].mxu0 %v886
    %v888 = vpop.f32.mrb[0].mxu0
    %v889 = vadd.f32 %v786, %v888
    %v890 = vpop.f32.mrb[0].mxu0
    %891 = vmatprep.mubr.f32.mxu0 0.0
    %v892 = vand.u32 %v690, 4294901760
    %893 = vmatmul.mubr.f32.gmra.mrb[0].mxu0 %v892
    %v894 = vpop.f32.mrb[0].mxu0
    %v895 = vadd.f32 %v796, %v894
    %v896 = vpop.f32.mrb[0].mxu0
    %897 = vdwg.mxu0
    %898 = vmatprep.subr.mxu0 0.0
    %v899 = vand.u32 %v678, 4294901760
    %v900 = vsub.f32 %v678, %v899
    %901 = vmatpush1.msra.mxu0 %v900
    %902 = vmatprep.subr.mxu0 0.0
    %v903 = vand.u32 %v679, 4294901760
    %v904 = vsub.f32 %v679, %v903
    %905 = vmatpush1.msra.mxu0 %v904
    %906 = vmatprep.subr.mxu0 0.0
    %907 = vmatpush1.msra.mxu0 0.0
    %908 = vmatprep.subr.mxu0 0.0
    %909 = vmatpush1.msra.mxu0 0.0
    %910 = vmatprep.subr.mxu0 0.0
    %911 = vmatpush1.msra.mxu0 0.0
    %912 = vmatprep.subr.mxu0 0.0
    %913 = vmatpush1.msra.mxu0 0.0
    %914 = vmatprep.subr.mxu0 0.0
    %915 = vmatpush1.msra.mxu0 0.0
    %916 = vmatprep.subr.mxu0 0.0
    %917 = vmatpush1.msra.mxu0 0.0
    %918 = vmatprep.subr.mxu0 0.0
    %919 = vmatpush1.msra.mxu0 0.0
    %920 = vmatprep.subr.mxu0 0.0
    %921 = vmatpush1.msra.mxu0 0.0
    %922 = vmatprep.subr.mxu0 0.0
    %923 = vmatpush1.msra.mxu0 0.0
    %924 = vmatprep.subr.mxu0 0.0
    %925 = vmatpush1.msra.mxu0 0.0
    %926 = vmatprep.subr.mxu0 0.0
    %927 = vmatpush1.msra.mxu0 0.0
    %928 = vmatprep.subr.mxu0 0.0
    %929 = vmatpush1.msra.mxu0 0.0
    %930 = vmatprep.subr.mxu0 0.0
    %931 = vmatpush1.msra.mxu0 0.0
    %932 = vmatprep.subr.mxu0 0.0
    %933 = vmatpush1.msra.mxu0 0.0
    %934 = vmatprep.subr.mxu0 0.0
    %935 = vmatpush1.msra.mxu0 0.0
    %936 = vmatprep.subr.mxu0 0.0
    %937 = vmatpush1.msra.mxu0 0.0
    %938 = vmatprep.subr.mxu0 0.0
    %939 = vmatpush1.msra.mxu0 0.0
    %940 = vmatprep.subr.mxu0 0.0
    %941 = vmatpush1.msra.mxu0 0.0
    %942 = vmatprep.subr.mxu0 0.0
    %943 = vmatpush1.msra.mxu0 0.0
    %944 = vmatprep.subr.mxu0 0.0
    %945 = vmatpush1.msra.mxu0 0.0
    %946 = vmatprep.subr.mxu0 0.0
    %947 = vmatpush1.msra.mxu0 0.0
    %948 = vmatprep.subr.mxu0 0.0
    %949 = vmatpush1.msra.mxu0 0.0
    %950 = vmatprep.subr.mxu0 0.0
    %951 = vmatpush1.msra.mxu0 0.0
    %952 = vmatprep.subr.mxu0 0.0
    %953 = vmatpush1.msra.mxu0 0.0
    %954 = vmatprep.subr.mxu0 0.0
    %955 = vmatpush1.msra.mxu0 0.0
    %956 = vmatprep.subr.mxu0 0.0
    %957 = vmatpush1.msra.mxu0 0.0
    %958 = vmatprep.subr.mxu0 0.0
    %959 = vmatpush1.msra.mxu0 0.0
    %960 = vmatprep.subr.mxu0 0.0
    %961 = vmatpush1.msra.mxu0 0.0
    %962 = vmatprep.subr.mxu0 0.0
    %963 = vmatpush1.msra.mxu0 0.0
    %964 = vmatprep.subr.mxu0 0.0
    %965 = vmatpush1.msra.mxu0 0.0
    %966 = vmatprep.mubr.f32.mxu0 0.0
    %v967 = vand.u32 %v681, 4294901760
    %v968 = vsub.f32 %v681, %v967
    %969 = vmatmul.mubr.f32.gmra.mrb[0].mxu0 %v968
    %v970 = vpop.f32.mrb[0].mxu0
    %v971 = vadd.f32 %v877, %v970
    %v972 = vpop.f32.mrb[0].mxu0
    %973 = vmatprep.mubr.f32.mxu0 0.0
    %v974 = vand.u32 %v684, 4294901760
    %v975 = vsub.f32 %v684, %v974
    %976 = vmatmul.mubr.f32.gmra.mrb[0].mxu0 %v975
    %v977 = vpop.f32.mrb[0].mxu0
    %v978 = vadd.f32 %v883, %v977
    %v979 = vpop.f32.mrb[0].mxu0
    %980 = vmatprep.mubr.f32.mxu0 0.0
    %v981 = vand.u32 %v687, 4294901760
    %v982 = vsub.f32 %v687, %v981
    %983 = vmatmul.mubr.f32.gmra.mrb[0].mxu0 %v982
    %v984 = vpop.f32.mrb[0].mxu0
    %v985 = vadd.f32 %v889, %v984
    %v986 = vpop.f32.mrb[0].mxu0
    %987 = vmatprep.mubr.f32.mxu0 0.0
    %v988 = vand.u32 %v690, 4294901760
    %v989 = vsub.f32 %v690, %v988
    %990 = vmatmul.mubr.f32.gmra.mrb[0].mxu0 %v989
    %v991 = vpop.f32.mrb[0].mxu0
    %v992 = vadd.f32 %v895, %v991
    %v993 = vpop.f32.mrb[0].mxu0
    %994 = vdwg.mxu0
    %995 = vmatprep.subr.mxu0 0.0
    %v996 = vand.u32 %v678, 4294901760
    %997 = vmatpush1.msra.mxu0 %v996
    %998 = vmatprep.subr.mxu0 0.0
    %v999 = vand.u32 %v679, 4294901760
    %1000 = vmatpush1.msra.mxu0 %v999
    %1001 = vmatprep.subr.mxu0 0.0
    %1002 = vmatpush1.msra.mxu0 0.0
    %1003 = vmatprep.subr.mxu0 0.0
    %1004 = vmatpush1.msra.mxu0 0.0
    %1005 = vmatprep.subr.mxu0 0.0
    %1006 = vmatpush1.msra.mxu0 0.0
    %1007 = vmatprep.subr.mxu0 0.0
    %1008 = vmatpush1.msra.mxu0 0.0
    %1009 = vmatprep.subr.mxu0 0.0
    %1010 = vmatpush1.msra.mxu0 0.0
    %1011 = vmatprep.subr.mxu0 0.0
    %1012 = vmatpush1.msra.mxu0 0.0
    %1013 = vmatprep.subr.mxu0 0.0
    %1014 = vmatpush1.msra.mxu0 0.0
    %1015 = vmatprep.subr.mxu0 0.0
    %1016 = vmatpush1.msra.mxu0 0.0
    %1017 = vmatprep.subr.mxu0 0.0
    %1018 = vmatpush1.msra.mxu0 0.0
    %1019 = vmatprep.subr.mxu0 0.0
    %1020 = vmatpush1.msra.mxu0 0.0
    %1021 = vmatprep.subr.mxu0 0.0
    %1022 = vmatpush1.msra.mxu0 0.0
    %1023 = vmatprep.subr.mxu0 0.0
    %1024 = vmatpush1.msra.mxu0 0.0
    %1025 = vmatprep.subr.mxu0 0.0
    %1026 = vmatpush1.msra.mxu0 0.0
    %1027 = vmatprep.subr.mxu0 0.0
    %1028 = vmatpush1.msra.mxu0 0.0
    %1029 = vmatprep.subr.mxu0 0.0
    %1030 = vmatpush1.msra.mxu0 0.0
    %1031 = vmatprep.subr.mxu0 0.0
    %1032 = vmatpush1.msra.mxu0 0.0
    %1033 = vmatprep.subr.mxu0 0.0
    %1034 = vmatpush1.msra.mxu0 0.0
    %1035 = vmatprep.subr.mxu0 0.0
    %1036 = vmatpush1.msra.mxu0 0.0
    %1037 = vmatprep.subr.mxu0 0.0
    %1038 = vmatpush1.msra.mxu0 0.0
    %1039 = vmatprep.subr.mxu0 0.0
    %1040 = vmatpush1.msra.mxu0 0.0
    %1041 = vmatprep.subr.mxu0 0.0
    %1042 = vmatpush1.msra.mxu0 0.0
    %1043 = vmatprep.subr.mxu0 0.0
    %1044 = vmatpush1.msra.mxu0 0.0
    %1045 = vmatprep.subr.mxu0 0.0
    %1046 = vmatpush1.msra.mxu0 0.0
    %1047 = vmatprep.subr.mxu0 0.0
    %1048 = vmatpush1.msra.mxu0 0.0
    %1049 = vmatprep.subr.mxu0 0.0
    %1050 = vmatpush1.msra.mxu0 0.0
    %1051 = vmatprep.subr.mxu0 0.0
    %1052 = vmatpush1.msra.mxu0 0.0
    %1053 = vmatprep.subr.mxu0 0.0
    %1054 = vmatpush1.msra.mxu0 0.0
    %1055 = vmatprep.subr.mxu0 0.0
    %1056 = vmatpush1.msra.mxu0 0.0
    %1057 = vmatprep.subr.mxu0 0.0
    %1058 = vmatpush1.msra.mxu0 0.0
    %1059 = vmatprep.subr.mxu0 0.0
    %1060 = vmatpush1.msra.mxu0 0.0
    %1061 = vmatprep.mubr.f32.mxu0 0.0
    %v1062 = vand.u32 %v681, 4294901760
    %v1063 = vsub.f32 %v681, %v1062
    %v1064 = vand.u32 %v1063, 4294901760
    %1065 = vmatmul.mubr.f32.gmra.mrb[0].mxu0 %v1064
    %v1066 = vpop.f32.mrb[0].mxu0
    %v1067 = vadd.f32 %v971, %v1066
    %v1068 = vpop.f32.mrb[0].mxu0
    %1069 = vmatprep.mubr.f32.mxu0 0.0
    %v1070 = vand.u32 %v684, 4294901760
    %v1071 = vsub.f32 %v684, %v1070
    %v1072 = vand.u32 %v1071, 4294901760
    %1073 = vmatmul.mubr.f32.gmra.mrb[0].mxu0 %v1072
    %v1074 = vpop.f32.mrb[0].mxu0
    %v1075 = vadd.f32 %v978, %v1074
    %v1076 = vpop.f32.mrb[0].mxu0
    %1077 = vmatprep.mubr.f32.mxu0 0.0
    %v1078 = vand.u32 %v687, 4294901760
    %v1079 = vsub.f32 %v687, %v1078
    %v1080 = vand.u32 %v1079, 4294901760
    %1081 = vmatmul.mubr.f32.gmra.mrb[0].mxu0 %v1080
    %v1082 = vpop.f32.mrb[0].mxu0
    %v1083 = vadd.f32 %v985, %v1082
    %v1084 = vpop.f32.mrb[0].mxu0
    %1085 = vmatprep.mubr.f32.mxu0 0.0
    %v1086 = vand.u32 %v690, 4294901760
    %v1087 = vsub.f32 %v690, %v1086
    %v1088 = vand.u32 %v1087, 4294901760
    %1089 = vmatmul.mubr.f32.gmra.mrb[0].mxu0 %v1088
    %v1090 = vpop.f32.mrb[0].mxu0
    %v1091 = vadd.f32 %v992, %v1090
    %v1092 = vpop.f32.mrb[0].mxu0
    %1093 = vdwg.mxu0
    %1094 = vmatprep.subr.mxu0 0.0
    %v1095 = vand.u32 %v678, 4294901760
    %v1096 = vsub.f32 %v678, %v1095
    %v1097 = vand.u32 %v1096, 4294901760
    %1098 = vmatpush1.msra.mxu0 %v1097
    %1099 = vmatprep.subr.mxu0 0.0
    %v1100 = vand.u32 %v679, 4294901760
    %v1101 = vsub.f32 %v679, %v1100
    %v1102 = vand.u32 %v1101, 4294901760
    %1103 = vmatpush1.msra.mxu0 %v1102
    %1104 = vmatprep.subr.mxu0 0.0
    %1105 = vmatpush1.msra.mxu0 0.0
    %1106 = vmatprep.subr.mxu0 0.0
    %1107 = vmatpush1.msra.mxu0 0.0
    %1108 = vmatprep.subr.mxu0 0.0
    %1109 = vmatpush1.msra.mxu0 0.0
    %1110 = vmatprep.subr.mxu0 0.0
    %1111 = vmatpush1.msra.mxu0 0.0
    %1112 = vmatprep.subr.mxu0 0.0
    %1113 = vmatpush1.msra.mxu0 0.0
    %1114 = vmatprep.subr.mxu0 0.0
    %1115 = vmatpush1.msra.mxu0 0.0
    %1116 = vmatprep.subr.mxu0 0.0
    %1117 = vmatpush1.msra.mxu0 0.0
    %1118 = vmatprep.subr.mxu0 0.0
    %1119 = vmatpush1.msra.mxu0 0.0
    %1120 = vmatprep.subr.mxu0 0.0
    %1121 = vmatpush1.msra.mxu0 0.0
    %1122 = vmatprep.subr.mxu0 0.0
    %1123 = vmatpush1.msra.mxu0 0.0
    %1124 = vmatprep.subr.mxu0 0.0
    %1125 = vmatpush1.msra.mxu0 0.0
    %1126 = vmatprep.subr.mxu0 0.0
    %1127 = vmatpush1.msra.mxu0 0.0
    %1128 = vmatprep.subr.mxu0 0.0
    %1129 = vmatpush1.msra.mxu0 0.0
    %1130 = vmatprep.subr.mxu0 0.0
    %1131 = vmatpush1.msra.mxu0 0.0
    %1132 = vmatprep.subr.mxu0 0.0
    %1133 = vmatpush1.msra.mxu0 0.0
    %1134 = vmatprep.subr.mxu0 0.0
    %1135 = vmatpush1.msra.mxu0 0.0
    %1136 = vmatprep.subr.mxu0 0.0
    %1137 = vmatpush1.msra.mxu0 0.0
    %1138 = vmatprep.subr.mxu0 0.0
    %1139 = vmatpush1.msra.mxu0 0.0
    %1140 = vmatprep.subr.mxu0 0.0
    %1141 = vmatpush1.msra.mxu0 0.0
    %1142 = vmatprep.subr.mxu0 0.0
    %1143 = vmatpush1.msra.mxu0 0.0
    %1144 = vmatprep.subr.mxu0 0.0
    %1145 = vmatpush1.msra.mxu0 0.0
    %1146 = vmatprep.subr.mxu0 0.0
    %1147 = vmatpush1.msra.mxu0 0.0
    %1148 = vmatprep.subr.mxu0 0.0
    %1149 = vmatpush1.msra.mxu0 0.0
    %1150 = vmatprep.subr.mxu0 0.0
    %1151 = vmatpush1.msra.mxu0 0.0
    %1152 = vmatprep.subr.mxu0 0.0
    %1153 = vmatpush1.msra.mxu0 0.0
    %1154 = vmatprep.subr.mxu0 0.0
    %1155 = vmatpush1.msra.mxu0 0.0
    %1156 = vmatprep.subr.mxu0 0.0
    %1157 = vmatpush1.msra.mxu0 0.0
    %1158 = vmatprep.subr.mxu0 0.0
    %1159 = vmatpush1.msra.mxu0 0.0
    %1160 = vmatprep.subr.mxu0 0.0
    %1161 = vmatpush1.msra.mxu0 0.0
    %1162 = vmatprep.subr.mxu0 0.0
    %1163 = vmatpush1.msra.mxu0 0.0
    %1164 = vmatprep.mubr.f32.mxu0 0.0
    %v1165 = vand.u32 %v681, 4294901760
    %1166 = vmatmul.mubr.f32.gmra.mrb[0].mxu0 %v1165
    %v1167 = vpop.f32.mrb[0].mxu0
    %v1168 = vadd.f32 %v1067, %v1167
    %v1169 = vpop.f32.mrb[0].mxu0
    %1170 = vmatprep.mubr.f32.mxu0 0.0
    %v1171 = vand.u32 %v684, 4294901760
    %1172 = vmatmul.mubr.f32.gmra.mrb[0].mxu0 %v1171
    %v1173 = vpop.f32.mrb[0].mxu0
    %v1174 = vadd.f32 %v1075, %v1173
    %v1175 = vpop.f32.mrb[0].mxu0
    %1176 = vmatprep.mubr.f32.mxu0 0.0
    %v1177 = vand.u32 %v687, 4294901760
    %1178 = vmatmul.mubr.f32.gmra.mrb[0].mxu0 %v1177
    %v1179 = vpop.f32.mrb[0].mxu0
    %v1180 = vadd.f32 %v1083, %v1179
    %v1181 = vpop.f32.mrb[0].mxu0
    %1182 = vmatprep.mubr.f32.mxu0 0.0
    %v1183 = vand.u32 %v690, 4294901760
    %1184 = vmatmul.mubr.f32.gmra.mrb[0].mxu0 %v1183
    %v1185 = vpop.f32.mrb[0].mxu0
    %v1186 = vadd.f32 %v1091, %v1185
    %v1187 = vpop.f32.mrb[0].mxu0
    %1188 = vdwg.mxu0
    %1189 = vmatprep.subr.mxu0 0.0
    %v1190 = vand.u32 %v678, 4294901760
    %1191 = vmatpush1.msra.mxu0 %v1190
    %1192 = vmatprep.subr.mxu0 0.0
    %v1193 = vand.u32 %v679, 4294901760
    %1194 = vmatpush1.msra.mxu0 %v1193
    %1195 = vmatprep.subr.mxu0 0.0
    %1196 = vmatpush1.msra.mxu0 0.0
    %1197 = vmatprep.subr.mxu0 0.0
    %1198 = vmatpush1.msra.mxu0 0.0
    %1199 = vmatprep.subr.mxu0 0.0
    %1200 = vmatpush1.msra.mxu0 0.0
    %1201 = vmatprep.subr.mxu0 0.0
    %1202 = vmatpush1.msra.mxu0 0.0
    %1203 = vmatprep.subr.mxu0 0.0
    %1204 = vmatpush1.msra.mxu0 0.0
    %1205 = vmatprep.subr.mxu0 0.0
    %1206 = vmatpush1.msra.mxu0 0.0
    %1207 = vmatprep.subr.mxu0 0.0
    %1208 = vmatpush1.msra.mxu0 0.0
    %1209 = vmatprep.subr.mxu0 0.0
    %1210 = vmatpush1.msra.mxu0 0.0
    %1211 = vmatprep.subr.mxu0 0.0
    %1212 = vmatpush1.msra.mxu0 0.0
    %1213 = vmatprep.subr.mxu0 0.0
    %1214 = vmatpush1.msra.mxu0 0.0
    %1215 = vmatprep.subr.mxu0 0.0
    %1216 = vmatpush1.msra.mxu0 0.0
    %1217 = vmatprep.subr.mxu0 0.0
    %1218 = vmatpush1.msra.mxu0 0.0
    %1219 = vmatprep.subr.mxu0 0.0
    %1220 = vmatpush1.msra.mxu0 0.0
    %1221 = vmatprep.subr.mxu0 0.0
    %1222 = vmatpush1.msra.mxu0 0.0
    %1223 = vmatprep.subr.mxu0 0.0
    %1224 = vmatpush1.msra.mxu0 0.0
    %1225 = vmatprep.subr.mxu0 0.0
    %1226 = vmatpush1.msra.mxu0 0.0
    %1227 = vmatprep.subr.mxu0 0.0
    %1228 = vmatpush1.msra.mxu0 0.0
    %1229 = vmatprep.subr.mxu0 0.0
    %1230 = vmatpush1.msra.mxu0 0.0
    %1231 = vmatprep.subr.mxu0 0.0
    %1232 = vmatpush1.msra.mxu0 0.0
    %1233 = vmatprep.subr.mxu0 0.0
    %1234 = vmatpush1.msra.mxu0 0.0
    %1235 = vmatprep.subr.mxu0 0.0
    %1236 = vmatpush1.msra.mxu0 0.0
    %1237 = vmatprep.subr.mxu0 0.0
    %1238 = vmatpush1.msra.mxu0 0.0
    %1239 = vmatprep.subr.mxu0 0.0
    %1240 = vmatpush1.msra.mxu0 0.0
    %1241 = vmatprep.subr.mxu0 0.0
    %1242 = vmatpush1.msra.mxu0 0.0
    %1243 = vmatprep.subr.mxu0 0.0
    %1244 = vmatpush1.msra.mxu0 0.0
    %1245 = vmatprep.subr.mxu0 0.0
    %1246 = vmatpush1.msra.mxu0 0.0
    %1247 = vmatprep.subr.mxu0 0.0
    %1248 = vmatpush1.msra.mxu0 0.0
    %1249 = vmatprep.subr.mxu0 0.0
    %1250 = vmatpush1.msra.mxu0 0.0
    %1251 = vmatprep.subr.mxu0 0.0
    %1252 = vmatpush1.msra.mxu0 0.0
    %1253 = vmatprep.subr.mxu0 0.0
    %1254 = vmatpush1.msra.mxu0 0.0
    %1255 = vmatprep.mubr.f32.mxu0 0.0
    %v1256 = vand.u32 %v681, 4294901760
    %1257 = vmatmul.mubr.f32.gmra.mrb[0].mxu0 %v1256
    %v1258 = vpop.f32.mrb[0].mxu0
    %v1259 = vadd.f32 %v1168, %v1258
    %v1260 = vpop.f32.mrb[0].mxu0
    %1261 = vmatprep.mubr.f32.mxu0 0.0
    %v1262 = vand.u32 %v684, 4294901760
    %1263 = vmatmul.mubr.f32.gmra.mrb[0].mxu0 %v1262
    %v1264 = vpop.f32.mrb[0].mxu0
    %v1265 = vadd.f32 %v1174, %v1264
    %v1266 = vpop.f32.mrb[0].mxu0
    %1267 = vmatprep.mubr.f32.mxu0 0.0
    %v1268 = vand.u32 %v687, 4294901760
    %1269 = vmatmul.mubr.f32.gmra.mrb[0].mxu0 %v1268
    %v1270 = vpop.f32.mrb[0].mxu0
    %v1271 = vadd.f32 %v1180, %v1270
    %v1272 = vpop.f32.mrb[0].mxu0
    %1273 = vmatprep.mubr.f32.mxu0 0.0
    %v1274 = vand.u32 %v690, 4294901760
    %1275 = vmatmul.mubr.f32.gmra.mrb[0].mxu0 %v1274
    %v1276 = vpop.f32.mrb[0].mxu0
    %v1277 = vadd.f32 %v1186, %v1276
    %v1278 = vpop.f32.mrb[0].mxu0
    %1279 = vdwg.mxu0
    %1280 = vst [vmem:[#allocation4] sm:$0xff] %v669
    %1281 = vst [vmem:[#allocation4 + $0x10] sm:$0xff] %v675
    %1282 = vst [vmem:[#allocation4 + $0x8] sm:$0xff] %v1259
    %1283 = vst [vmem:[#allocation4 + $0x18] sm:$0xff] %v1265
    %1284 = vst [vmem:[#allocation6] sm:$0xff] %v1259
    %1285 = vst [vmem:[#allocation6 + $0x10] sm:$0xff] %v1265
    %1286 = vst [vmem:[#allocation6 + $0x8] sm:$0xff] %v669
    %1287 = vst [vmem:[#allocation6 + $0x18] sm:$0xff] %v675
    %1288 = vst [vmem:[#allocation8] sm:$0xff] %v1271
    %1289 = vst [vmem:[#allocation8 + $0x10] sm:$0xff] %v1277
    %1290 = vst [vmem:[#allocation8 + $0x8] sm:$0xff] %v669
    %1291 = vst [vmem:[#allocation8 + $0x18] sm:$0xff] %v675
    %1292 = vst [vmem:[#allocation9] sm:$0xff] %v669
    %1293 = vst [vmem:[#allocation9 + $0x10] sm:$0xff] %v675
    %1294 = vst [vmem:[#allocation9 + $0x8] sm:$0xff] %v1271
    %1295 = vst [vmem:[#allocation9 + $0x18] sm:$0xff] %v1277
    // Predicated region
    $region88: #{tpu_custom_call.1} parent=1 // pred_check
      _
    $region89: #{tpu_custom_call.1} parent=1 // pred_check_branch
      %1297 = sbr.rel (0) target = $region91
    $region90: #{tpu_custom_call.1} parent=1 // pred_region
      %s1299 = ssub.s32 512, 512
      %1300 = vsyncadd [#allocation5], %s1299
      %s1301 = sshll.u32 [#allocation4], 4
      %s1302 = int_to_ptr.vmem [resolvable:$true] %s1301
      %1307 = dma.vmem_to_hbm [thread:$0]  %s1302, 512, %s5, [#allocation5], 256, 256, 16
    $region91: #{tpu_custom_call.1} parent=1 // pred_fallthru
      _
    // Predicated region
    $region92: #{tpu_custom_call.1} parent=1 // pred_check
      _
    $region93: #{tpu_custom_call.1} parent=1 // pred_check_branch
      %1309 = sbr.rel (0) target = $region95
    $region94: #{tpu_custom_call.1} parent=1 // pred_region
      %s1311 = ssub.s32 512, 512
      %1312 = vsyncadd [#allocation7], %s1311
      %s1313 = sshll.u32 [#allocation6], 4
      %s1314 = int_to_ptr.vmem [resolvable:$true] %s1313
      %1319 = dma.vmem_to_hbm [thread:$0]  %s1314, 512, %s6, [#allocation7], 256, 256, 16
    $region95: #{tpu_custom_call.1} parent=1 // pred_fallthru
      _
    // Predicated region
    $region96: #{tpu_custom_call.1} parent=1 // pred_check
      _
    $region97: #{tpu_custom_call.1} parent=1 // pred_check_branch
      %1321 = sbr.rel (0) target = $region99
    $region98: #{tpu_custom_call.1} parent=1 // pred_region
      %s1323 = ssub.s32 512, 512
      %1324 = vsyncadd [#allocation7], %s1323
      %s1325 = sshll.u32 [#allocation8], 4
      %s1326 = int_to_ptr.vmem [resolvable:$true] %s1325
      %1331 = dma.vmem_to_hbm [thread:$0]  %s1326, 512, %s7, [#allocation7], 256, 256, 16
    $region99: #{tpu_custom_call.1} parent=1 // pred_fallthru
      _
    // Predicated region
    $region100: #{tpu_custom_call.1} parent=1 // pred_check
      _
    $region101: #{tpu_custom_call.1} parent=1 // pred_check_branch
      %1333 = sbr.rel (0) target = $region103
    $region102: #{tpu_custom_call.1} parent=1 // pred_region
      %s1335 = ssub.s32 512, 512
      %1336 = vsyncadd [#allocation10], %s1335
      %s1337 = sshll.u32 [#allocation9], 4
      %s1338 = int_to_ptr.vmem [resolvable:$true] %s1337
      %1343 = dma.vmem_to_hbm [thread:$0]  %s1338, 512, %s8, [#allocation10], 256, 256, 16
    $region103: #{tpu_custom_call.1} parent=1 // pred_fallthru
      _
    // Predicated region
    $region104: #{tpu_custom_call.1} parent=1 // pred_check
      _
    $region105: #{tpu_custom_call.1} parent=1 // pred_check_branch
      %1345 = sbr.rel (0) target = $region107
    $region106: #{tpu_custom_call.1} parent=1 // pred_region
      %1346 = dma.done [#allocation5], 512
    $region107: #{tpu_custom_call.1} parent=1 // pred_fallthru
      _
    // Predicated region
    $region108: #{tpu_custom_call.1} parent=1 // pred_check
      _
    $region109: #{tpu_custom_call.1} parent=1 // pred_check_branch
      %1348 = sbr.rel (0) target = $region111
    $region110: #{tpu_custom_call.1} parent=1 // pred_region
      %1349 = dma.done [#allocation7], 512
    $region111: #{tpu_custom_call.1} parent=1 // pred_fallthru
      _
    // Predicated region
    $region112: #{tpu_custom_call.1} parent=1 // pred_check
      _
    $region113: #{tpu_custom_call.1} parent=1 // pred_check_branch
      %1351 = sbr.rel (0) target = $region115
    $region114: #{tpu_custom_call.1} parent=1 // pred_region
      %1352 = dma.done [#allocation7], 512
    $region115: #{tpu_custom_call.1} parent=1 // pred_fallthru
      _
    // Predicated region
    $region116: #{tpu_custom_call.1} parent=1 // pred_check
      _
    $region117: #{tpu_custom_call.1} parent=1 // pred_check_branch
      %1354 = sbr.rel (0) target = $region119
    $region118: #{tpu_custom_call.1} parent=1 // pred_region
      %1355 = dma.done [#allocation10], 512
    $region119: #{tpu_custom_call.1} parent=1 // pred_fallthru
      _
    %1356 = vsyncpa [#allocation5], 1
    %1357 = vsyncpa [#allocation7], 1
    %1358 = vsyncpa [#allocation10], 1

</llo_original>
